<compile_context>
chip_gen: v6e
topology: v6e:2x2x1
jax: 0.10.0
libtpu: 0.0.40
codegen_flags: <defaults>
</compile_context>

<pallas_src>
import functools
import math

import jax
import jax.numpy as jnp
from jax import lax
from jax.experimental import pallas as pl
from jax.experimental.pallas import tpu as pltpu

_TILE_M_MAX = 2048
_LANE = 128


def _round_up(x, m):
    return (x + m - 1) // m * m


def _choose_tile_m(hw, m):
    """Lane tile: multiple of lcm(per-image spatial size, 128) so tiles hold
    whole images (taps never cross a tile) and stores are lane-dense.  Prefer
    big tiles, but keep >= 2 grid steps when there is enough work so v7x's
    two TensorCores both share the ("parallel",) axis."""
    base = hw * _LANE // math.gcd(hw, _LANE)      # lcm(hw, 128)
    tile = base
    while tile * 2 <= _TILE_M_MAX:
        tile *= 2
    while tile > base and _round_up(m, base) <= tile:
        tile //= 2
    return tile


def _cparams():
    # 32 MiB scoped VMEM: above v5e's 16 MiB default (needed for the larger
    # lane tiles) and comfortably under v7x's 64 MiB physical budget.
    return pltpu.CompilerParams(
        dimension_semantics=("parallel",),
        vmem_limit_bytes=32 * 1024 * 1024)


# ----------------------------- in-kernel math --------------------------------

def _mish(x):
    # mish(x) = x * tanh(softplus(x)); tanh(log s) = (s^2-1)/(s^2+1), s = 1+e^x
    e = jnp.exp(jnp.minimum(x, 20.0))
    s = 1.0 + e
    ss = s * s
    t = (ss - 1.0) * pl.reciprocal(ss + 1.0, approx=True)
    t = jnp.where(x > 20.0, 1.0, t)          # large-x passthrough
    return x * t


def _shift_lanes(a, d):
    """Circular lane shift: out[:, m] = a[:, (m + d) mod M] (d static)."""
    tm = a.shape[-1]
    d = d % tm
    if d == 0:
        return a
    return jnp.concatenate([a[:, d:], a[:, :d]], axis=1)


def _taps_3x3_s1(a, wo, mask9):
    """Stride-1 3x3 taps of a (C, TM) tile -> (9*C, TM), (dy, dx, cin) order.
    mask9[(oy+1)*3+(ox+1)] is the 0/1 in-image validity pattern for that tap
    (tiles hold whole images, so wrap-around columns are always masked)."""
    parts = []
    for oy in (-1, 0, 1):
        for ox in (-1, 0, 1):
            t = _shift_lanes(a, oy * wo + ox)
            if oy != 0 or ox != 0:
                k = (oy + 1) * 3 + (ox + 1)
                t = t * mask9[k:k + 1, :]
            parts.append(t)
    return jnp.concatenate(parts, axis=0)


def _taps_3x3_s2(xg, cin, wo, mask9):
    """Stride-2 3x3 taps from the space-to-depth input (4*Cin, TM).
    Phase group g = py*2+px holds x[:, :, py::2, px::2]; kernel tap (dy, dx)
    maps to phase (py, px) with an in-phase shift of -1 or 0."""
    parts = []
    for dy in range(3):
        py, sy = ((1, -1), (0, 0), (1, 0))[dy]
        for dx in range(3):
            px, sx = ((1, -1), (0, 0), (1, 0))[dx]
            g = py * 2 + px
            t = _shift_lanes(xg[g * cin:(g + 1) * cin, :], sy * wo + sx)
            if sy != 0 or sx != 0:
                k = dy * 3 + dx
                t = t * mask9[k:k + 1, :]
            parts.append(t)
    return jnp.concatenate(parts, axis=0)


# ------------------------------ Pallas kernel ---------------------------------

def _cspdark_kernel(*refs, depth, cin, wo):
    x_ref, ms2_ref, ms1_ref = refs[0:3]
    w_in_ref, b_in_ref, w_m0_ref, b_m0_ref = refs[3:7]
    res_refs = refs[7:7 + 4 * depth]
    (w_ml_ref, b_ml_ref, w_bp_ref, b_bp_ref,
     w_o1_ref, w_o2_ref, b_o_ref, o_ref) = refs[7 + 4 * depth:]

    ms2 = ms2_ref[...]
    ms1 = ms1_ref[...]

    # in_conv: 3x3 stride-2 ConvBnAct(Mish); taps built in-kernel from the
    # space-to-depth tile -> one deep (Cout, 9*Cin) contraction.
    taps_in = _taps_3x3_s2(x_ref[...], cin, wo, ms2)
    h = _mish(jnp.dot(w_in_ref[...], taps_in,
                      preferred_element_type=jnp.float32) + b_in_ref[...])
    h_bf = h.astype(jnp.bfloat16)

    # csp.main_conv[0]: 1x1 ConvBnAct(Mish)
    m = _mish(jnp.dot(w_m0_ref[...], h_bf,
                      preferred_element_type=jnp.float32) + b_m0_ref[...])

    # ResBlocks: 1x1 + 3x3 + residual, entirely in VMEM/vregs (residual in f32).
    for d in range(depth):
        w1_ref, b1_ref, w2_ref, b2_ref = res_refs[4 * d:4 * d + 4]
        r = _mish(jnp.dot(w1_ref[...], m.astype(jnp.bfloat16),
                          preferred_element_type=jnp.float32) + b1_ref[...])
        taps_r = _taps_3x3_s1(r.astype(jnp.bfloat16), wo, ms1)
        m = _mish(jnp.dot(w2_ref[...], taps_r,
                          preferred_element_type=jnp.float32) + b2_ref[...]) + m

    # Tail: main_conv[-1] 1x1 + bypass 1x1, each with its folded half of
    # csp.bn, Mish, then out_conv 1x1 over the (implicit) concatenation.
    h1 = _mish(jnp.dot(w_ml_ref[...], m.astype(jnp.bfloat16),
                       preferred_element_type=jnp.float32) + b_ml_ref[...])
    h2 = _mish(jnp.dot(w_bp_ref[...], h_bf,
                       preferred_element_type=jnp.float32) + b_bp_ref[...])
    acc = (jnp.dot(w_o1_ref[...], h1.astype(jnp.bfloat16),
                   preferred_element_type=jnp.float32)
           + jnp.dot(w_o2_ref[...], h2.astype(jnp.bfloat16),
                     preferred_element_type=jnp.float32)
           + b_o_ref[...])
    o_ref[...] = _mish(acc).astype(o_ref.dtype)


# --------------------------------- JAX glue ------------------------------------

def _build_tap_masks(ho, wo, tile_m):
    """(9, tile_m) 0/1 bf16 validity patterns (per-image periodic) for the
    stride-1 and stride-2 tap sets.  Constant-folded by XLA."""
    hw = ho * wo
    mm = jnp.arange(tile_m, dtype=jnp.int32) % hw
    y = mm // wo
    x = mm % wo
    rows_s1, rows_s2 = [], []
    for oy in (-1, 0, 1):
        vy = (y + oy >= 0) & (y + oy < ho)
        for ox in (-1, 0, 1):
            vx = (x + ox >= 0) & (x + ox < wo)
            rows_s1.append(vy & vx)
    for dy in range(3):
        sy = -1 if dy == 0 else 0
        vy = y + sy >= 0
        for dx in range(3):
            sx = -1 if dx == 0 else 0
            vx = x + sx >= 0
            rows_s2.append(vy & vx)
    s1 = jnp.stack(rows_s1).astype(jnp.bfloat16)
    s2 = jnp.stack(rows_s2).astype(jnp.bfloat16)
    return s2, s1


def csp_dark_block_forward(x_nchw, p, depth):
    n, cin, hh, ww = x_nchw.shape
    assert hh % 2 == 0 and ww % 2 == 0, "even spatial dims required"
    ho, wo = hh // 2, ww // 2
    hw = ho * wo
    m_rows = n * hw
    tile_m = _choose_tile_m(hw, m_rows)
    m_pad = _round_up(m_rows, tile_m)
    cout = p['in_conv']['w2d'].shape[0]

    # Space-to-depth (phase) split of the input: same byte count (no im2col
    # blow-up); cast to bf16 before any padding/concat.
    x_c = jnp.transpose(x_nchw, (1, 0, 2, 3)).astype(jnp.bfloat16)  # (Cin,N,H,W)
    groups = [x_c[:, :, py::2, px::2] for py in (0, 1) for px in (0, 1)]
    x_s2d = jnp.concatenate(groups, axis=0).reshape(4 * cin, m_rows)
    if m_pad != m_rows:
        x_s2d = jnp.pad(x_s2d, ((0, 0), (0, m_pad - m_rows)))

    mask_s2, mask_s1 = _build_tap_masks(ho, wo, tile_m)

    weights = [p['in_conv']['w2d'], p['in_conv']['b'],
               p['main0']['w2d'], p['main0']['b']]
    for d in range(depth):
        c1, c2 = p['res'][d]
        weights += [c1['w2d'], c1['b'], c2['w2d'], c2['b']]
    weights += [p['main_last']['w2d'], p['main_last']['b'],
                p['bypass']['w2d'], p['bypass']['b'],
                p['out_w1'], p['out_w2'], p['out_b']]

    def act_spec(rows):
        return pl.BlockSpec((rows, tile_m), lambda i: (0, i))

    def full_spec(a):
        return pl.BlockSpec(a.shape, lambda i: (0, 0))

    kernel = functools.partial(_cspdark_kernel, depth=depth, cin=cin, wo=wo)
    out = pl.pallas_call(
        kernel,
        out_shape=jax.ShapeDtypeStruct((cout, m_pad), jnp.bfloat16),
        grid=(m_pad // tile_m,),
        in_specs=([act_spec(4 * cin), full_spec(mask_s2), full_spec(mask_s1)]
                  + [full_spec(w) for w in weights]),
        out_specs=act_spec(cout),
        compiler_params=_cparams(),
    )(x_s2d, mask_s2, mask_s1, *weights)

    out = out[:, :m_rows].reshape(cout, n, ho, wo)
    return jnp.transpose(out, (1, 0, 2, 3))     # NCHW, bf16


# ----------------------------- parameter setup --------------------------------

def _fold_bn(conv_b, gamma, beta, mean, var, eps):
    scale = gamma / jnp.sqrt(var + eps)
    bias = beta + (conv_b - mean) * scale
    return scale, bias


def _prep(w_hwio, scale, bias):
    """Fold BN scale into the conv weight; (Cout, K*Cin) bf16 + (Cout,1) f32."""
    kh, kw, cin, cout = w_hwio.shape
    w2d = jnp.transpose(w_hwio, (3, 0, 1, 2)).reshape(cout, kh * kw * cin)
    w2d = (w2d * scale[:, None]).astype(jnp.bfloat16)
    return dict(w2d=w2d, b=bias.reshape(cout, 1).astype(jnp.float32))


def _make_cba(key, kh, cin, cout, eps=1e-5):
    ks = jax.random.split(key, 6)
    fan = kh * kh * cin
    w = jax.random.normal(ks[0], (kh, kh, cin, cout), jnp.float32) / math.sqrt(fan)
    b = jax.random.normal(ks[1], (cout,), jnp.float32) * 0.1
    gamma = jax.random.uniform(ks[2], (cout,), jnp.float32, 0.5, 1.5)
    beta = jax.random.normal(ks[3], (cout,), jnp.float32) * 0.1
    mean = jax.random.normal(ks[4], (cout,), jnp.float32) * 0.1
    var = jax.random.uniform(ks[5], (cout,), jnp.float32, 0.5, 1.5)
    scale, bias = _fold_bn(b, gamma, beta, mean, var, eps)
    return _prep(w, scale, bias)


def init_params(key, cin, cout, depth):
    half = cout // 2
    keys = jax.random.split(key, 6 + 2 * depth)
    p = {}
    p['in_conv'] = _make_cba(keys[0], 3, cin, cout)      # ConvBnAct(cin, cout, 3, s2)
    p['main0'] = _make_cba(keys[1], 1, cout, half)       # ConvBnAct(cout, half, 1)
    p['res'] = []
    for d in range(depth):
        p['res'].append((_make_cba(keys[2 + 2 * d], 1, half, half),
                         _make_cba(keys[3 + 2 * d], 3, half, half)))
    kk = keys[2 + 2 * depth:]
    # main_conv[-1] / bypass_conv: bias-free 1x1 convs followed by csp.bn
    # (eps=0.001) + Mish applied to the concatenation -> split BN per half.
    w_main_last = jax.random.normal(kk[0], (1, 1, half, half), jnp.float32) / math.sqrt(half)
    w_bypass = jax.random.normal(kk[1], (1, 1, cout, half), jnp.float32) / math.sqrt(cout)
    kb = jax.random.split(kk[2], 4)
    gamma = jax.random.uniform(kb[0], (cout,), jnp.float32, 0.5, 1.5)
    beta = jax.random.normal(kb[1], (cout,), jnp.float32) * 0.1
    mean = jax.random.normal(kb[2], (cout,), jnp.float32) * 0.1
    var = jax.random.uniform(kb[3], (cout,), jnp.float32, 0.5, 1.5)
    eps = 0.001  # BN_PARAMS
    zero = jnp.zeros((half,), jnp.float32)
    s1, b1 = _fold_bn(zero, gamma[:half], beta[:half], mean[:half], var[:half], eps)
    s2, b2 = _fold_bn(zero, gamma[half:], beta[half:], mean[half:], var[half:], eps)
    p['main_last'] = _prep(w_main_last, s1, b1)
    p['bypass'] = _prep(w_bypass, s2, b2)
    # out_conv: ConvBnAct(cout, cout, 1); split its input columns so the tail
    # consumes (h1, h2) directly without materializing the concat.
    out_cba = _make_cba(kk[3], 1, cout, cout)
    p['out_w1'] = out_cba['w2d'][:, :half]
    p['out_w2'] = out_cba['w2d'][:, half:]
    p['out_b'] = out_cba['b']
    return p


# ------------------------ pure-XLA reference (checking) ------------------------

def reference_forward(x_nchw, p, depth):
    """Same folded weights & bf16 cast points, but spatial convs via lax.conv."""
    f32, bf16 = jnp.float32, jnp.bfloat16

    def mish(v):
        return v * jnp.tanh(jax.nn.softplus(v))

    def conv3x3(a, w2d, b, stride):
        cout_, k9 = w2d.shape
        cin_ = k9 // 9
        w = w2d.reshape(cout_, 3, 3, cin_).transpose(1, 2, 3, 0)   # HWIO
        y = lax.conv_general_dilated(
            a.astype(bf16).astype(f32), w.astype(f32),
            window_strides=(stride, stride), padding=((1, 1), (1, 1)),
            dimension_numbers=('NCHW', 'HWIO', 'NCHW'))
        return y + b.reshape(1, -1, 1, 1)

    def conv1x1(a, w2d, b):
        y = jnp.einsum('oc,nchw->nohw', w2d.astype(f32),
                       a.astype(bf16).astype(f32))
        return y + b.reshape(1, -1, 1, 1)

    h = mish(conv3x3(x_nchw, p['in_conv']['w2d'], p['in_conv']['b'], 2))
    m = mish(conv1x1(h, p['main0']['w2d'], p['main0']['b']))
    for d in range(depth):
        c1, c2 = p['res'][d]
        r = mish(conv1x1(m, c1['w2d'], c1['b']))
        m = mish(conv3x3(r, c2['w2d'], c2['b'], 1)) + m
    h1 = mish(conv1x1(m, p['main_last']['w2d'], p['main_last']['b']))
    h2 = mish(conv1x1(h, p['bypass']['w2d'], p['bypass']['b']))
    out = (conv1x1(h1, p['out_w1'], p['out_b'])
           + jnp.einsum('oc,nchw->nohw', p['out_w2'].astype(f32),
                        h2.astype(bf16).astype(f32)))
    return mish(out)


# ----------------------------------- main --------------------------------------

if __name__ == "__main__":
    in_channels, out_channels, depth = 4, 8, 1
    key = jax.random.PRNGKey(0)
    k_x, k_p = jax.random.split(key)

    x = jax.random.normal(k_x, (2, in_channels, 16, 16), jnp.float32)
    params = init_params(k_p, in_channels, out_channels, depth)

    fwd = jax.jit(functools.partial(csp_dark_block_forward, depth=depth))
    y = jax.block_until_ready(fwd(x, params))

    assert y.shape == (2, out_channels, 8, 8), y.shape
    assert bool(jnp.all(jnp.isfinite(y)))

    # Correctness vs. a pure-XLA reference (same folded weights / cast points);
    # tolerance covers the bf16 output store and the approx-reciprocal Mish.
    y_ref = reference_forward(x, params, depth)
    y32 = y.astype(jnp.float32)
    ok = bool(jnp.allclose(y32, y_ref, rtol=2e-2, atol=2e-2))
    assert ok, ("kernel/reference mismatch, max abs err = "
                f"{float(jnp.max(jnp.abs(y32 - y_ref)))}")
    print("KERNEL_OK")
</pallas_src>

<mosaic_0001>
module attributes {stable_mosaic.version = 11 : i64} {
  func.func @_cspdark_kernel(%arg0: i32, %arg1: memref<16x128xbf16, #tpu.memory_space<vmem>>, %arg2: memref<9x128xbf16, #tpu.memory_space<vmem>>, %arg3: memref<9x128xbf16, #tpu.memory_space<vmem>>, %arg4: memref<8x36xbf16, #tpu.memory_space<vmem>>, %arg5: memref<8x1xf32, #tpu.memory_space<vmem>>, %arg6: memref<4x8xbf16, #tpu.memory_space<vmem>>, %arg7: memref<4x1xf32, #tpu.memory_space<vmem>>, %arg8: memref<4x4xbf16, #tpu.memory_space<vmem>>, %arg9: memref<4x1xf32, #tpu.memory_space<vmem>>, %arg10: memref<4x36xbf16, #tpu.memory_space<vmem>>, %arg11: memref<4x1xf32, #tpu.memory_space<vmem>>, %arg12: memref<4x4xbf16, #tpu.memory_space<vmem>>, %arg13: memref<4x1xf32, #tpu.memory_space<vmem>>, %arg14: memref<4x8xbf16, #tpu.memory_space<vmem>>, %arg15: memref<4x1xf32, #tpu.memory_space<vmem>>, %arg16: memref<8x4xbf16, #tpu.memory_space<vmem>>, %arg17: memref<8x4xbf16, #tpu.memory_space<vmem>>, %arg18: memref<8x1xf32, #tpu.memory_space<vmem>>, %arg19: memref<8x128xbf16, #tpu.memory_space<vmem>>) attributes {dimension_semantics = [#tpu.dimension_semantics<parallel>], iteration_bounds = array<i64: 1>, scalar_prefetch = 0 : i64, scratch_operands = 0 : i64, tpu.core_type = #tpu.core_type<tc>, window_params = [{transform_indices = @transform_0, window_bounds = array<i64: 16, 128>}, {pipeline_mode = #tpu.pipeline_mode<synchronous>, transform_indices = @transform_1, window_bounds = array<i64: 9, 128>}, {pipeline_mode = #tpu.pipeline_mode<synchronous>, transform_indices = @transform_2, window_bounds = array<i64: 9, 128>}, {pipeline_mode = #tpu.pipeline_mode<synchronous>, transform_indices = @transform_3, window_bounds = array<i64: 8, 36>}, {pipeline_mode = #tpu.pipeline_mode<synchronous>, transform_indices = @transform_4, window_bounds = array<i64: 8, 1>}, {pipeline_mode = #tpu.pipeline_mode<synchronous>, transform_indices = @transform_5, window_bounds = array<i64: 4, 8>}, {pipeline_mode = #tpu.pipeline_mode<synchronous>, transform_indices = @transform_6, window_bounds = array<i64: 4, 1>}, {pipeline_mode = #tpu.pipeline_mode<synchronous>, transform_indices = @transform_7, window_bounds = array<i64: 4, 4>}, {pipeline_mode = #tpu.pipeline_mode<synchronous>, transform_indices = @transform_8, window_bounds = array<i64: 4, 1>}, {pipeline_mode = #tpu.pipeline_mode<synchronous>, transform_indices = @transform_9, window_bounds = array<i64: 4, 36>}, {pipeline_mode = #tpu.pipeline_mode<synchronous>, transform_indices = @transform_10, window_bounds = array<i64: 4, 1>}, {pipeline_mode = #tpu.pipeline_mode<synchronous>, transform_indices = @transform_11, window_bounds = array<i64: 4, 4>}, {pipeline_mode = #tpu.pipeline_mode<synchronous>, transform_indices = @transform_12, window_bounds = array<i64: 4, 1>}, {pipeline_mode = #tpu.pipeline_mode<synchronous>, transform_indices = @transform_13, window_bounds = array<i64: 4, 8>}, {pipeline_mode = #tpu.pipeline_mode<synchronous>, transform_indices = @transform_14, window_bounds = array<i64: 4, 1>}, {pipeline_mode = #tpu.pipeline_mode<synchronous>, transform_indices = @transform_15, window_bounds = array<i64: 8, 4>}, {pipeline_mode = #tpu.pipeline_mode<synchronous>, transform_indices = @transform_16, window_bounds = array<i64: 8, 4>}, {pipeline_mode = #tpu.pipeline_mode<synchronous>, transform_indices = @transform_17, window_bounds = array<i64: 8, 1>}, {transform_indices = @transform_18, window_bounds = array<i64: 8, 128>}]} {
    %c0 = arith.constant 0 : index
    %c0_0 = arith.constant 0 : index
    %0 = vector.load %arg2[%c0, %c0_0] : memref<9x128xbf16, #tpu.memory_space<vmem>>, vector<9x128xbf16>
    %c0_1 = arith.constant 0 : index
    %c0_2 = arith.constant 0 : index
    %1 = vector.load %arg3[%c0_1, %c0_2] : memref<9x128xbf16, #tpu.memory_space<vmem>>, vector<9x128xbf16>
    %c0_3 = arith.constant 0 : index
    %c0_4 = arith.constant 0 : index
    %2 = vector.load %arg1[%c0_3, %c0_4] : memref<16x128xbf16, #tpu.memory_space<vmem>>, vector<16x128xbf16>
    %3 = vector.extract_strided_slice %2 {offsets = [12, 0], sizes = [4, 128], strides = [1, 1]} : vector<16x128xbf16> to vector<4x128xbf16>
    %4 = vector.extract_strided_slice %3 {offsets = [0, 119], sizes = [4, 9], strides = [1, 1]} : vector<4x128xbf16> to vector<4x9xbf16>
    %5 = vector.extract_strided_slice %3 {offsets = [0, 0], sizes = [4, 119], strides = [1, 1]} : vector<4x128xbf16> to vector<4x119xbf16>
    %6 = tpu.concatenate %4, %5 in 1 : vector<4x9xbf16>, vector<4x119xbf16> -> vector<4x128xbf16>
    %7 = vector.extract_strided_slice %0 {offsets = [0, 0], sizes = [1, 128], strides = [1, 1]} : vector<9x128xbf16> to vector<1x128xbf16>
    %8 = vector.broadcast %7 : vector<1x128xbf16> to vector<4x128xbf16>
    %9 = arith.mulf %6, %8 : vector<4x128xbf16>
    %10 = vector.extract_strided_slice %2 {offsets = [8, 0], sizes = [4, 128], strides = [1, 1]} : vector<16x128xbf16> to vector<4x128xbf16>
    %11 = vector.extract_strided_slice %10 {offsets = [0, 120], sizes = [4, 8], strides = [1, 1]} : vector<4x128xbf16> to vector<4x8xbf16>
    %12 = vector.extract_strided_slice %10 {offsets = [0, 0], sizes = [4, 120], strides = [1, 1]} : vector<4x128xbf16> to vector<4x120xbf16>
    %13 = tpu.concatenate %11, %12 in 1 : vector<4x8xbf16>, vector<4x120xbf16> -> vector<4x128xbf16>
    %14 = vector.extract_strided_slice %0 {offsets = [1, 0], sizes = [1, 128], strides = [1, 1]} : vector<9x128xbf16> to vector<1x128xbf16>
    %15 = vector.broadcast %14 : vector<1x128xbf16> to vector<4x128xbf16>
    %16 = arith.mulf %13, %15 : vector<4x128xbf16>
    %17 = vector.extract_strided_slice %2 {offsets = [12, 0], sizes = [4, 128], strides = [1, 1]} : vector<16x128xbf16> to vector<4x128xbf16>
    %18 = vector.extract_strided_slice %17 {offsets = [0, 120], sizes = [4, 8], strides = [1, 1]} : vector<4x128xbf16> to vector<4x8xbf16>
    %19 = vector.extract_strided_slice %17 {offsets = [0, 0], sizes = [4, 120], strides = [1, 1]} : vector<4x128xbf16> to vector<4x120xbf16>
    %20 = tpu.concatenate %18, %19 in 1 : vector<4x8xbf16>, vector<4x120xbf16> -> vector<4x128xbf16>
    %21 = vector.extract_strided_slice %0 {offsets = [2, 0], sizes = [1, 128], strides = [1, 1]} : vector<9x128xbf16> to vector<1x128xbf16>
    %22 = vector.broadcast %21 : vector<1x128xbf16> to vector<4x128xbf16>
    %23 = arith.mulf %20, %22 : vector<4x128xbf16>
    %24 = vector.extract_strided_slice %2 {offsets = [4, 0], sizes = [4, 128], strides = [1, 1]} : vector<16x128xbf16> to vector<4x128xbf16>
    %25 = vector.extract_strided_slice %24 {offsets = [0, 127], sizes = [4, 1], strides = [1, 1]} : vector<4x128xbf16> to vector<4x1xbf16>
    %26 = vector.extract_strided_slice %24 {offsets = [0, 0], sizes = [4, 127], strides = [1, 1]} : vector<4x128xbf16> to vector<4x127xbf16>
    %27 = tpu.concatenate %25, %26 in 1 : vector<4x1xbf16>, vector<4x127xbf16> -> vector<4x128xbf16>
    %28 = vector.extract_strided_slice %0 {offsets = [3, 0], sizes = [1, 128], strides = [1, 1]} : vector<9x128xbf16> to vector<1x128xbf16>
    %29 = vector.broadcast %28 : vector<1x128xbf16> to vector<4x128xbf16>
    %30 = arith.mulf %27, %29 : vector<4x128xbf16>
    %31 = vector.extract_strided_slice %2 {offsets = [0, 0], sizes = [4, 128], strides = [1, 1]} : vector<16x128xbf16> to vector<4x128xbf16>
    %32 = vector.extract_strided_slice %2 {offsets = [4, 0], sizes = [4, 128], strides = [1, 1]} : vector<16x128xbf16> to vector<4x128xbf16>
    %33 = vector.extract_strided_slice %2 {offsets = [12, 0], sizes = [4, 128], strides = [1, 1]} : vector<16x128xbf16> to vector<4x128xbf16>
    %34 = vector.extract_strided_slice %33 {offsets = [0, 127], sizes = [4, 1], strides = [1, 1]} : vector<4x128xbf16> to vector<4x1xbf16>
    %35 = vector.extract_strided_slice %33 {offsets = [0, 0], sizes = [4, 127], strides = [1, 1]} : vector<4x128xbf16> to vector<4x127xbf16>
    %36 = tpu.concatenate %34, %35 in 1 : vector<4x1xbf16>, vector<4x127xbf16> -> vector<4x128xbf16>
    %37 = vector.extract_strided_slice %0 {offsets = [6, 0], sizes = [1, 128], strides = [1, 1]} : vector<9x128xbf16> to vector<1x128xbf16>
    %38 = vector.broadcast %37 : vector<1x128xbf16> to vector<4x128xbf16>
    %39 = arith.mulf %36, %38 : vector<4x128xbf16>
    %40 = vector.extract_strided_slice %2 {offsets = [8, 0], sizes = [4, 128], strides = [1, 1]} : vector<16x128xbf16> to vector<4x128xbf16>
    %41 = vector.extract_strided_slice %2 {offsets = [12, 0], sizes = [4, 128], strides = [1, 1]} : vector<16x128xbf16> to vector<4x128xbf16>
    %42 = tpu.concatenate %9, %16, %23, %30, %31, %32, %39, %40, %41 in 0 : vector<4x128xbf16>, vector<4x128xbf16>, vector<4x128xbf16>, vector<4x128xbf16>, vector<4x128xbf16>, vector<4x128xbf16>, vector<4x128xbf16>, vector<4x128xbf16>, vector<4x128xbf16> -> vector<36x128xbf16>
    %c0_5 = arith.constant 0 : index
    %c0_6 = arith.constant 0 : index
    %43 = vector.load %arg4[%c0_5, %c0_6] : memref<8x36xbf16, #tpu.memory_space<vmem>>, vector<8x36xbf16>
    %cst = arith.constant dense<0.000000e+00> : vector<8x128xf32>
    %44 = tpu.matmul %43, %42, %cst {dimension_numbers = #tpu.dot_dimension_numbers<[1], [0], [0], [1], [0, 0, 1, 1], [], []>} : vector<8x36xbf16>, vector<36x128xbf16>, vector<8x128xf32> -> vector<8x128xf32>
    %c0_7 = arith.constant 0 : index
    %c0_8 = arith.constant 0 : index
    %45 = vector.load %arg5[%c0_7, %c0_8] : memref<8x1xf32, #tpu.memory_space<vmem>>, vector<8x1xf32>
    %46 = vector.broadcast %45 : vector<8x1xf32> to vector<8x128xf32>
    %47 = arith.addf %44, %46 : vector<8x128xf32>
    %cst_9 = arith.constant 2.000000e+01 : f32
    %48 = vector.broadcast %cst_9 : f32 to vector<8x128xf32>
    %49 = arith.minimumf %47, %48 : vector<8x128xf32>
    %50 = math.exp %49 : vector<8x128xf32>
    %cst_10 = arith.constant 1.000000e+00 : f32
    %51 = vector.broadcast %cst_10 : f32 to vector<8x128xf32>
    %52 = arith.addf %51, %50 : vector<8x128xf32>
    %53 = arith.mulf %52, %52 : vector<8x128xf32>
    %cst_11 = arith.constant 1.000000e+00 : f32
    %54 = vector.broadcast %cst_11 : f32 to vector<8x128xf32>
    %55 = arith.subf %53, %54 : vector<8x128xf32>
    %cst_12 = arith.constant 1.000000e+00 : f32
    %56 = vector.broadcast %cst_12 : f32 to vector<8x128xf32>
    %57 = arith.addf %53, %56 : vector<8x128xf32>
    %58 = tpu.reciprocal %57 {approx = true} : vector<8x128xf32> -> vector<8x128xf32>
    %59 = arith.mulf %55, %58 : vector<8x128xf32>
    %cst_13 = arith.constant 2.000000e+01 : f32
    %60 = vector.broadcast %cst_13 : f32 to vector<8x128xf32>
    %61 = arith.cmpf ogt, %47, %60 : vector<8x128xf32>
    %cst_14 = arith.constant 1.000000e+00 : f32
    %62 = vector.broadcast %cst_14 : f32 to vector<8x128xf32>
    %63 = arith.select %61, %62, %59 : vector<8x128xi1>, vector<8x128xf32>
    %64 = arith.mulf %47, %63 : vector<8x128xf32>
    %65 = arith.truncf %64 : vector<8x128xf32> to vector<8x128xbf16>
    %c0_15 = arith.constant 0 : index
    %c0_16 = arith.constant 0 : index
    %66 = vector.load %arg6[%c0_15, %c0_16] : memref<4x8xbf16, #tpu.memory_space<vmem>>, vector<4x8xbf16>
    %cst_17 = arith.constant dense<0.000000e+00> : vector<4x128xf32>
    %67 = tpu.matmul %66, %65, %cst_17 {dimension_numbers = #tpu.dot_dimension_numbers<[1], [0], [0], [1], [0, 0, 1, 1], [], []>} : vector<4x8xbf16>, vector<8x128xbf16>, vector<4x128xf32> -> vector<4x128xf32>
    %c0_18 = arith.constant 0 : index
    %c0_19 = arith.constant 0 : index
    %68 = vector.load %arg7[%c0_18, %c0_19] : memref<4x1xf32, #tpu.memory_space<vmem>>, vector<4x1xf32>
    %69 = vector.broadcast %68 : vector<4x1xf32> to vector<4x128xf32>
    %70 = arith.addf %67, %69 : vector<4x128xf32>
    %cst_20 = arith.constant 2.000000e+01 : f32
    %71 = vector.broadcast %cst_20 : f32 to vector<4x128xf32>
    %72 = arith.minimumf %70, %71 : vector<4x128xf32>
    %73 = math.exp %72 : vector<4x128xf32>
    %cst_21 = arith.constant 1.000000e+00 : f32
    %74 = vector.broadcast %cst_21 : f32 to vector<4x128xf32>
    %75 = arith.addf %74, %73 : vector<4x128xf32>
    %76 = arith.mulf %75, %75 : vector<4x128xf32>
    %cst_22 = arith.constant 1.000000e+00 : f32
    %77 = vector.broadcast %cst_22 : f32 to vector<4x128xf32>
    %78 = arith.subf %76, %77 : vector<4x128xf32>
    %cst_23 = arith.constant 1.000000e+00 : f32
    %79 = vector.broadcast %cst_23 : f32 to vector<4x128xf32>
    %80 = arith.addf %76, %79 : vector<4x128xf32>
    %81 = tpu.reciprocal %80 {approx = true} : vector<4x128xf32> -> vector<4x128xf32>
    %82 = arith.mulf %78, %81 : vector<4x128xf32>
    %cst_24 = arith.constant 2.000000e+01 : f32
    %83 = vector.broadcast %cst_24 : f32 to vector<4x128xf32>
    %84 = arith.cmpf ogt, %70, %83 : vector<4x128xf32>
    %cst_25 = arith.constant 1.000000e+00 : f32
    %85 = vector.broadcast %cst_25 : f32 to vector<4x128xf32>
    %86 = arith.select %84, %85, %82 : vector<4x128xi1>, vector<4x128xf32>
    %87 = arith.mulf %70, %86 : vector<4x128xf32>
    %c0_26 = arith.constant 0 : index
    %c0_27 = arith.constant 0 : index
    %88 = vector.load %arg8[%c0_26, %c0_27] : memref<4x4xbf16, #tpu.memory_space<vmem>>, vector<4x4xbf16>
    %89 = arith.truncf %87 : vector<4x128xf32> to vector<4x128xbf16>
    %cst_28 = arith.constant dense<0.000000e+00> : vector<4x128xf32>
    %90 = tpu.matmul %88, %89, %cst_28 {dimension_numbers = #tpu.dot_dimension_numbers<[1], [0], [0], [1], [0, 0, 1, 1], [], []>} : vector<4x4xbf16>, vector<4x128xbf16>, vector<4x128xf32> -> vector<4x128xf32>
    %c0_29 = arith.constant 0 : index
    %c0_30 = arith.constant 0 : index
    %91 = vector.load %arg9[%c0_29, %c0_30] : memref<4x1xf32, #tpu.memory_space<vmem>>, vector<4x1xf32>
    %92 = vector.broadcast %91 : vector<4x1xf32> to vector<4x128xf32>
    %93 = arith.addf %90, %92 : vector<4x128xf32>
    %cst_31 = arith.constant 2.000000e+01 : f32
    %94 = vector.broadcast %cst_31 : f32 to vector<4x128xf32>
    %95 = arith.minimumf %93, %94 : vector<4x128xf32>
    %96 = math.exp %95 : vector<4x128xf32>
    %cst_32 = arith.constant 1.000000e+00 : f32
    %97 = vector.broadcast %cst_32 : f32 to vector<4x128xf32>
    %98 = arith.addf %97, %96 : vector<4x128xf32>
    %99 = arith.mulf %98, %98 : vector<4x128xf32>
    %cst_33 = arith.constant 1.000000e+00 : f32
    %100 = vector.broadcast %cst_33 : f32 to vector<4x128xf32>
    %101 = arith.subf %99, %100 : vector<4x128xf32>
    %cst_34 = arith.constant 1.000000e+00 : f32
    %102 = vector.broadcast %cst_34 : f32 to vector<4x128xf32>
    %103 = arith.addf %99, %102 : vector<4x128xf32>
    %104 = tpu.reciprocal %103 {approx = true} : vector<4x128xf32> -> vector<4x128xf32>
    %105 = arith.mulf %101, %104 : vector<4x128xf32>
    %cst_35 = arith.constant 2.000000e+01 : f32
    %106 = vector.broadcast %cst_35 : f32 to vector<4x128xf32>
    %107 = arith.cmpf ogt, %93, %106 : vector<4x128xf32>
    %cst_36 = arith.constant 1.000000e+00 : f32
    %108 = vector.broadcast %cst_36 : f32 to vector<4x128xf32>
    %109 = arith.select %107, %108, %105 : vector<4x128xi1>, vector<4x128xf32>
    %110 = arith.mulf %93, %109 : vector<4x128xf32>
    %111 = arith.truncf %110 : vector<4x128xf32> to vector<4x128xbf16>
    %112 = vector.extract_strided_slice %111 {offsets = [0, 119], sizes = [4, 9], strides = [1, 1]} : vector<4x128xbf16> to vector<4x9xbf16>
    %113 = vector.extract_strided_slice %111 {offsets = [0, 0], sizes = [4, 119], strides = [1, 1]} : vector<4x128xbf16> to vector<4x119xbf16>
    %114 = tpu.concatenate %112, %113 in 1 : vector<4x9xbf16>, vector<4x119xbf16> -> vector<4x128xbf16>
    %115 = vector.extract_strided_slice %1 {offsets = [0, 0], sizes = [1, 128], strides = [1, 1]} : vector<9x128xbf16> to vector<1x128xbf16>
    %116 = vector.broadcast %115 : vector<1x128xbf16> to vector<4x128xbf16>
    %117 = arith.mulf %114, %116 : vector<4x128xbf16>
    %118 = vector.extract_strided_slice %111 {offsets = [0, 120], sizes = [4, 8], strides = [1, 1]} : vector<4x128xbf16> to vector<4x8xbf16>
    %119 = vector.extract_strided_slice %111 {offsets = [0, 0], sizes = [4, 120], strides = [1, 1]} : vector<4x128xbf16> to vector<4x120xbf16>
    %120 = tpu.concatenate %118, %119 in 1 : vector<4x8xbf16>, vector<4x120xbf16> -> vector<4x128xbf16>
    %121 = vector.extract_strided_slice %1 {offsets = [1, 0], sizes = [1, 128], strides = [1, 1]} : vector<9x128xbf16> to vector<1x128xbf16>
    %122 = vector.broadcast %121 : vector<1x128xbf16> to vector<4x128xbf16>
    %123 = arith.mulf %120, %122 : vector<4x128xbf16>
    %124 = vector.extract_strided_slice %111 {offsets = [0, 121], sizes = [4, 7], strides = [1, 1]} : vector<4x128xbf16> to vector<4x7xbf16>
    %125 = vector.extract_strided_slice %111 {offsets = [0, 0], sizes = [4, 121], strides = [1, 1]} : vector<4x128xbf16> to vector<4x121xbf16>
    %126 = tpu.concatenate %124, %125 in 1 : vector<4x7xbf16>, vector<4x121xbf16> -> vector<4x128xbf16>
    %127 = vector.extract_strided_slice %1 {offsets = [2, 0], sizes = [1, 128], strides = [1, 1]} : vector<9x128xbf16> to vector<1x128xbf16>
    %128 = vector.broadcast %127 : vector<1x128xbf16> to vector<4x128xbf16>
    %129 = arith.mulf %126, %128 : vector<4x128xbf16>
    %130 = vector.extract_strided_slice %111 {offsets = [0, 127], sizes = [4, 1], strides = [1, 1]} : vector<4x128xbf16> to vector<4x1xbf16>
    %131 = vector.extract_strided_slice %111 {offsets = [0, 0], sizes = [4, 127], strides = [1, 1]} : vector<4x128xbf16> to vector<4x127xbf16>
    %132 = tpu.concatenate %130, %131 in 1 : vector<4x1xbf16>, vector<4x127xbf16> -> vector<4x128xbf16>
    %133 = vector.extract_strided_slice %1 {offsets = [3, 0], sizes = [1, 128], strides = [1, 1]} : vector<9x128xbf16> to vector<1x128xbf16>
    %134 = vector.broadcast %133 : vector<1x128xbf16> to vector<4x128xbf16>
    %135 = arith.mulf %132, %134 : vector<4x128xbf16>
    %136 = vector.extract_strided_slice %111 {offsets = [0, 1], sizes = [4, 127], strides = [1, 1]} : vector<4x128xbf16> to vector<4x127xbf16>
    %137 = vector.extract_strided_slice %111 {offsets = [0, 0], sizes = [4, 1], strides = [1, 1]} : vector<4x128xbf16> to vector<4x1xbf16>
    %138 = tpu.concatenate %136, %137 in 1 : vector<4x127xbf16>, vector<4x1xbf16> -> vector<4x128xbf16>
    %139 = vector.extract_strided_slice %1 {offsets = [5, 0], sizes = [1, 128], strides = [1, 1]} : vector<9x128xbf16> to vector<1x128xbf16>
    %140 = vector.broadcast %139 : vector<1x128xbf16> to vector<4x128xbf16>
    %141 = arith.mulf %138, %140 : vector<4x128xbf16>
    %142 = vector.extract_strided_slice %111 {offsets = [0, 7], sizes = [4, 121], strides = [1, 1]} : vector<4x128xbf16> to vector<4x121xbf16>
    %143 = vector.extract_strided_slice %111 {offsets = [0, 0], sizes = [4, 7], strides = [1, 1]} : vector<4x128xbf16> to vector<4x7xbf16>
    %144 = tpu.concatenate %142, %143 in 1 : vector<4x121xbf16>, vector<4x7xbf16> -> vector<4x128xbf16>
    %145 = vector.extract_strided_slice %1 {offsets = [6, 0], sizes = [1, 128], strides = [1, 1]} : vector<9x128xbf16> to vector<1x128xbf16>
    %146 = vector.broadcast %145 : vector<1x128xbf16> to vector<4x128xbf16>
    %147 = arith.mulf %144, %146 : vector<4x128xbf16>
    %148 = vector.extract_strided_slice %111 {offsets = [0, 8], sizes = [4, 120], strides = [1, 1]} : vector<4x128xbf16> to vector<4x120xbf16>
    %149 = vector.extract_strided_slice %111 {offsets = [0, 0], sizes = [4, 8], strides = [1, 1]} : vector<4x128xbf16> to vector<4x8xbf16>
    %150 = tpu.concatenate %148, %149 in 1 : vector<4x120xbf16>, vector<4x8xbf16> -> vector<4x128xbf16>
    %151 = vector.extract_strided_slice %1 {offsets = [7, 0], sizes = [1, 128], strides = [1, 1]} : vector<9x128xbf16> to vector<1x128xbf16>
    %152 = vector.broadcast %151 : vector<1x128xbf16> to vector<4x128xbf16>
    %153 = arith.mulf %150, %152 : vector<4x128xbf16>
    %154 = vector.extract_strided_slice %111 {offsets = [0, 9], sizes = [4, 119], strides = [1, 1]} : vector<4x128xbf16> to vector<4x119xbf16>
    %155 = vector.extract_strided_slice %111 {offsets = [0, 0], sizes = [4, 9], strides = [1, 1]} : vector<4x128xbf16> to vector<4x9xbf16>
    %156 = tpu.concatenate %154, %155 in 1 : vector<4x119xbf16>, vector<4x9xbf16> -> vector<4x128xbf16>
    %157 = vector.extract_strided_slice %1 {offsets = [8, 0], sizes = [1, 128], strides = [1, 1]} : vector<9x128xbf16> to vector<1x128xbf16>
    %158 = vector.broadcast %157 : vector<1x128xbf16> to vector<4x128xbf16>
    %159 = arith.mulf %156, %158 : vector<4x128xbf16>
    %160 = tpu.concatenate %117, %123, %129, %135, %111, %141, %147, %153, %159 in 0 : vector<4x128xbf16>, vector<4x128xbf16>, vector<4x128xbf16>, vector<4x128xbf16>, vector<4x128xbf16>, vector<4x128xbf16>, vector<4x128xbf16>, vector<4x128xbf16>, vector<4x128xbf16> -> vector<36x128xbf16>
    %c0_37 = arith.constant 0 : index
    %c0_38 = arith.constant 0 : index
    %161 = vector.load %arg10[%c0_37, %c0_38] : memref<4x36xbf16, #tpu.memory_space<vmem>>, vector<4x36xbf16>
    %cst_39 = arith.constant dense<0.000000e+00> : vector<4x128xf32>
    %162 = tpu.matmul %161, %160, %cst_39 {dimension_numbers = #tpu.dot_dimension_numbers<[1], [0], [0], [1], [0, 0, 1, 1], [], []>} : vector<4x36xbf16>, vector<36x128xbf16>, vector<4x128xf32> -> vector<4x128xf32>
    %c0_40 = arith.constant 0 : index
    %c0_41 = arith.constant 0 : index
    %163 = vector.load %arg11[%c0_40, %c0_41] : memref<4x1xf32, #tpu.memory_space<vmem>>, vector<4x1xf32>
    %164 = vector.broadcast %163 : vector<4x1xf32> to vector<4x128xf32>
    %165 = arith.addf %162, %164 : vector<4x128xf32>
    %cst_42 = arith.constant 2.000000e+01 : f32
    %166 = vector.broadcast %cst_42 : f32 to vector<4x128xf32>
    %167 = arith.minimumf %165, %166 : vector<4x128xf32>
    %168 = math.exp %167 : vector<4x128xf32>
    %cst_43 = arith.constant 1.000000e+00 : f32
    %169 = vector.broadcast %cst_43 : f32 to vector<4x128xf32>
    %170 = arith.addf %169, %168 : vector<4x128xf32>
    %171 = arith.mulf %170, %170 : vector<4x128xf32>
    %cst_44 = arith.constant 1.000000e+00 : f32
    %172 = vector.broadcast %cst_44 : f32 to vector<4x128xf32>
    %173 = arith.subf %171, %172 : vector<4x128xf32>
    %cst_45 = arith.constant 1.000000e+00 : f32
    %174 = vector.broadcast %cst_45 : f32 to vector<4x128xf32>
    %175 = arith.addf %171, %174 : vector<4x128xf32>
    %176 = tpu.reciprocal %175 {approx = true} : vector<4x128xf32> -> vector<4x128xf32>
    %177 = arith.mulf %173, %176 : vector<4x128xf32>
    %cst_46 = arith.constant 2.000000e+01 : f32
    %178 = vector.broadcast %cst_46 : f32 to vector<4x128xf32>
    %179 = arith.cmpf ogt, %165, %178 : vector<4x128xf32>
    %cst_47 = arith.constant 1.000000e+00 : f32
    %180 = vector.broadcast %cst_47 : f32 to vector<4x128xf32>
    %181 = arith.select %179, %180, %177 : vector<4x128xi1>, vector<4x128xf32>
    %182 = arith.mulf %165, %181 : vector<4x128xf32>
    %183 = arith.addf %182, %87 : vector<4x128xf32>
    %c0_48 = arith.constant 0 : index
    %c0_49 = arith.constant 0 : index
    %184 = vector.load %arg12[%c0_48, %c0_49] : memref<4x4xbf16, #tpu.memory_space<vmem>>, vector<4x4xbf16>
    %185 = arith.truncf %183 : vector<4x128xf32> to vector<4x128xbf16>
    %cst_50 = arith.constant dense<0.000000e+00> : vector<4x128xf32>
    %186 = tpu.matmul %184, %185, %cst_50 {dimension_numbers = #tpu.dot_dimension_numbers<[1], [0], [0], [1], [0, 0, 1, 1], [], []>} : vector<4x4xbf16>, vector<4x128xbf16>, vector<4x128xf32> -> vector<4x128xf32>
    %c0_51 = arith.constant 0 : index
    %c0_52 = arith.constant 0 : index
    %187 = vector.load %arg13[%c0_51, %c0_52] : memref<4x1xf32, #tpu.memory_space<vmem>>, vector<4x1xf32>
    %188 = vector.broadcast %187 : vector<4x1xf32> to vector<4x128xf32>
    %189 = arith.addf %186, %188 : vector<4x128xf32>
    %cst_53 = arith.constant 2.000000e+01 : f32
    %190 = vector.broadcast %cst_53 : f32 to vector<4x128xf32>
    %191 = arith.minimumf %189, %190 : vector<4x128xf32>
    %192 = math.exp %191 : vector<4x128xf32>
    %cst_54 = arith.constant 1.000000e+00 : f32
    %193 = vector.broadcast %cst_54 : f32 to vector<4x128xf32>
    %194 = arith.addf %193, %192 : vector<4x128xf32>
    %195 = arith.mulf %194, %194 : vector<4x128xf32>
    %cst_55 = arith.constant 1.000000e+00 : f32
    %196 = vector.broadcast %cst_55 : f32 to vector<4x128xf32>
    %197 = arith.subf %195, %196 : vector<4x128xf32>
    %cst_56 = arith.constant 1.000000e+00 : f32
    %198 = vector.broadcast %cst_56 : f32 to vector<4x128xf32>
    %199 = arith.addf %195, %198 : vector<4x128xf32>
    %200 = tpu.reciprocal %199 {approx = true} : vector<4x128xf32> -> vector<4x128xf32>
    %201 = arith.mulf %197, %200 : vector<4x128xf32>
    %cst_57 = arith.constant 2.000000e+01 : f32
    %202 = vector.broadcast %cst_57 : f32 to vector<4x128xf32>
    %203 = arith.cmpf ogt, %189, %202 : vector<4x128xf32>
    %cst_58 = arith.constant 1.000000e+00 : f32
    %204 = vector.broadcast %cst_58 : f32 to vector<4x128xf32>
    %205 = arith.select %203, %204, %201 : vector<4x128xi1>, vector<4x128xf32>
    %206 = arith.mulf %189, %205 : vector<4x128xf32>
    %c0_59 = arith.constant 0 : index
    %c0_60 = arith.constant 0 : index
    %207 = vector.load %arg14[%c0_59, %c0_60] : memref<4x8xbf16, #tpu.memory_space<vmem>>, vector<4x8xbf16>
    %cst_61 = arith.constant dense<0.000000e+00> : vector<4x128xf32>
    %208 = tpu.matmul %207, %65, %cst_61 {dimension_numbers = #tpu.dot_dimension_numbers<[1], [0], [0], [1], [0, 0, 1, 1], [], []>} : vector<4x8xbf16>, vector<8x128xbf16>, vector<4x128xf32> -> vector<4x128xf32>
    %c0_62 = arith.constant 0 : index
    %c0_63 = arith.constant 0 : index
    %209 = vector.load %arg15[%c0_62, %c0_63] : memref<4x1xf32, #tpu.memory_space<vmem>>, vector<4x1xf32>
    %210 = vector.broadcast %209 : vector<4x1xf32> to vector<4x128xf32>
    %211 = arith.addf %208, %210 : vector<4x128xf32>
    %cst_64 = arith.constant 2.000000e+01 : f32
    %212 = vector.broadcast %cst_64 : f32 to vector<4x128xf32>
    %213 = arith.minimumf %211, %212 : vector<4x128xf32>
    %214 = math.exp %213 : vector<4x128xf32>
    %cst_65 = arith.constant 1.000000e+00 : f32
    %215 = vector.broadcast %cst_65 : f32 to vector<4x128xf32>
    %216 = arith.addf %215, %214 : vector<4x128xf32>
    %217 = arith.mulf %216, %216 : vector<4x128xf32>
    %cst_66 = arith.constant 1.000000e+00 : f32
    %218 = vector.broadcast %cst_66 : f32 to vector<4x128xf32>
    %219 = arith.subf %217, %218 : vector<4x128xf32>
    %cst_67 = arith.constant 1.000000e+00 : f32
    %220 = vector.broadcast %cst_67 : f32 to vector<4x128xf32>
    %221 = arith.addf %217, %220 : vector<4x128xf32>
    %222 = tpu.reciprocal %221 {approx = true} : vector<4x128xf32> -> vector<4x128xf32>
    %223 = arith.mulf %219, %222 : vector<4x128xf32>
    %cst_68 = arith.constant 2.000000e+01 : f32
    %224 = vector.broadcast %cst_68 : f32 to vector<4x128xf32>
    %225 = arith.cmpf ogt, %211, %224 : vector<4x128xf32>
    %cst_69 = arith.constant 1.000000e+00 : f32
    %226 = vector.broadcast %cst_69 : f32 to vector<4x128xf32>
    %227 = arith.select %225, %226, %223 : vector<4x128xi1>, vector<4x128xf32>
    %228 = arith.mulf %211, %227 : vector<4x128xf32>
    %c0_70 = arith.constant 0 : index
    %c0_71 = arith.constant 0 : index
    %229 = vector.load %arg16[%c0_70, %c0_71] : memref<8x4xbf16, #tpu.memory_space<vmem>>, vector<8x4xbf16>
    %230 = arith.truncf %206 : vector<4x128xf32> to vector<4x128xbf16>
    %cst_72 = arith.constant dense<0.000000e+00> : vector<8x128xf32>
    %231 = tpu.matmul %229, %230, %cst_72 {dimension_numbers = #tpu.dot_dimension_numbers<[1], [0], [0], [1], [0, 0, 1, 1], [], []>} : vector<8x4xbf16>, vector<4x128xbf16>, vector<8x128xf32> -> vector<8x128xf32>
    %c0_73 = arith.constant 0 : index
    %c0_74 = arith.constant 0 : index
    %232 = vector.load %arg17[%c0_73, %c0_74] : memref<8x4xbf16, #tpu.memory_space<vmem>>, vector<8x4xbf16>
    %233 = arith.truncf %228 : vector<4x128xf32> to vector<4x128xbf16>
    %cst_75 = arith.constant dense<0.000000e+00> : vector<8x128xf32>
    %234 = tpu.matmul %232, %233, %cst_75 {dimension_numbers = #tpu.dot_dimension_numbers<[1], [0], [0], [1], [0, 0, 1, 1], [], []>} : vector<8x4xbf16>, vector<4x128xbf16>, vector<8x128xf32> -> vector<8x128xf32>
    %235 = arith.addf %231, %234 : vector<8x128xf32>
    %c0_76 = arith.constant 0 : index
    %c0_77 = arith.constant 0 : index
    %236 = vector.load %arg18[%c0_76, %c0_77] : memref<8x1xf32, #tpu.memory_space<vmem>>, vector<8x1xf32>
    %237 = vector.broadcast %236 : vector<8x1xf32> to vector<8x128xf32>
    %238 = arith.addf %235, %237 : vector<8x128xf32>
    %cst_78 = arith.constant 2.000000e+01 : f32
    %239 = vector.broadcast %cst_78 : f32 to vector<8x128xf32>
    %240 = arith.minimumf %238, %239 : vector<8x128xf32>
    %241 = math.exp %240 : vector<8x128xf32>
    %cst_79 = arith.constant 1.000000e+00 : f32
    %242 = vector.broadcast %cst_79 : f32 to vector<8x128xf32>
    %243 = arith.addf %242, %241 : vector<8x128xf32>
    %244 = arith.mulf %243, %243 : vector<8x128xf32>
    %cst_80 = arith.constant 1.000000e+00 : f32
    %245 = vector.broadcast %cst_80 : f32 to vector<8x128xf32>
    %246 = arith.subf %244, %245 : vector<8x128xf32>
    %cst_81 = arith.constant 1.000000e+00 : f32
    %247 = vector.broadcast %cst_81 : f32 to vector<8x128xf32>
    %248 = arith.addf %244, %247 : vector<8x128xf32>
    %249 = tpu.reciprocal %248 {approx = true} : vector<8x128xf32> -> vector<8x128xf32>
    %250 = arith.mulf %246, %249 : vector<8x128xf32>
    %cst_82 = arith.constant 2.000000e+01 : f32
    %251 = vector.broadcast %cst_82 : f32 to vector<8x128xf32>
    %252 = arith.cmpf ogt, %238, %251 : vector<8x128xf32>
    %cst_83 = arith.constant 1.000000e+00 : f32
    %253 = vector.broadcast %cst_83 : f32 to vector<8x128xf32>
    %254 = arith.select %252, %253, %250 : vector<8x128xi1>, vector<8x128xf32>
    %255 = arith.mulf %238, %254 : vector<8x128xf32>
    %256 = arith.truncf %255 : vector<8x128xf32> to vector<8x128xbf16>
    %c0_84 = arith.constant 0 : index
    %c0_85 = arith.constant 0 : index
    %257 = vector.load %arg19[%c0_84, %c0_85] : memref<8x128xbf16, #tpu.memory_space<vmem>>, vector<8x128xbf16>
    tpu.vector_store %arg19[%c0_84, %c0_85], %256 {strides = array<i32>} : memref<8x128xbf16, #tpu.memory_space<vmem>>, vector<8x128xbf16>,
    return
  }
  func.func @transform_0(%arg0: i32) -> (i32, i32) {
    %c0_i32 = arith.constant 0 : i32
    %c0_i32_0 = arith.constant 0 : i32
    return %c0_i32, %arg0 : i32, i32
  }
  func.func @transform_1(%arg0: i32) -> (i32, i32) {
    %c0_i32 = arith.constant 0 : i32
    %c0_i32_0 = arith.constant 0 : i32
    %c0_i32_1 = arith.constant 0 : i32
    return %c0_i32, %c0_i32_0 : i32, i32
  }
  func.func @transform_2(%arg0: i32) -> (i32, i32) {
    %c0_i32 = arith.constant 0 : i32
    %c0_i32_0 = arith.constant 0 : i32
    %c0_i32_1 = arith.constant 0 : i32
    return %c0_i32, %c0_i32_0 : i32, i32
  }
  func.func @transform_3(%arg0: i32) -> (i32, i32) {
    %c0_i32 = arith.constant 0 : i32
    %c0_i32_0 = arith.constant 0 : i32
    %c0_i32_1 = arith.constant 0 : i32
    return %c0_i32, %c0_i32_0 : i32, i32
  }
  func.func @transform_4(%arg0: i32) -> (i32, i32) {
    %c0_i32 = arith.constant 0 : i32
    %c0_i32_0 = arith.constant 0 : i32
    %c0_i32_1 = arith.constant 0 : i32
    return %c0_i32, %c0_i32_0 : i32, i32
  }
  func.func @transform_5(%arg0: i32) -> (i32, i32) {
    %c0_i32 = arith.constant 0 : i32
    %c0_i32_0 = arith.constant 0 : i32
    %c0_i32_1 = arith.constant 0 : i32
    return %c0_i32, %c0_i32_0 : i32, i32
  }
  func.func @transform_6(%arg0: i32) -> (i32, i32) {
    %c0_i32 = arith.constant 0 : i32
    %c0_i32_0 = arith.constant 0 : i32
    %c0_i32_1 = arith.constant 0 : i32
    return %c0_i32, %c0_i32_0 : i32, i32
  }
  func.func @transform_7(%arg0: i32) -> (i32, i32) {
    %c0_i32 = arith.constant 0 : i32
    %c0_i32_0 = arith.constant 0 : i32
    %c0_i32_1 = arith.constant 0 : i32
    return %c0_i32, %c0_i32_0 : i32, i32
  }
  func.func @transform_8(%arg0: i32) -> (i32, i32) {
    %c0_i32 = arith.constant 0 : i32
    %c0_i32_0 = arith.constant 0 : i32
    %c0_i32_1 = arith.constant 0 : i32
    return %c0_i32, %c0_i32_0 : i32, i32
  }
  func.func @transform_9(%arg0: i32) -> (i32, i32) {
    %c0_i32 = arith.constant 0 : i32
    %c0_i32_0 = arith.constant 0 : i32
    %c0_i32_1 = arith.constant 0 : i32
    return %c0_i32, %c0_i32_0 : i32, i32
  }
  func.func @transform_10(%arg0: i32) -> (i32, i32) {
    %c0_i32 = arith.constant 0 : i32
    %c0_i32_0 = arith.constant 0 : i32
    %c0_i32_1 = arith.constant 0 : i32
    return %c0_i32, %c0_i32_0 : i32, i32
  }
  func.func @transform_11(%arg0: i32) -> (i32, i32) {
    %c0_i32 = arith.constant 0 : i32
    %c0_i32_0 = arith.constant 0 : i32
    %c0_i32_1 = arith.constant 0 : i32
    return %c0_i32, %c0_i32_0 : i32, i32
  }
  func.func @transform_12(%arg0: i32) -> (i32, i32) {
    %c0_i32 = arith.constant 0 : i32
    %c0_i32_0 = arith.constant 0 : i32
    %c0_i32_1 = arith.constant 0 : i32
    return %c0_i32, %c0_i32_0 : i32, i32
  }
  func.func @transform_13(%arg0: i32) -> (i32, i32) {
    %c0_i32 = arith.constant 0 : i32
    %c0_i32_0 = arith.constant 0 : i32
    %c0_i32_1 = arith.constant 0 : i32
    return %c0_i32, %c0_i32_0 : i32, i32
  }
  func.func @transform_14(%arg0: i32) -> (i32, i32) {
    %c0_i32 = arith.constant 0 : i32
    %c0_i32_0 = arith.constant 0 : i32
    %c0_i32_1 = arith.constant 0 : i32
    return %c0_i32, %c0_i32_0 : i32, i32
  }
  func.func @transform_15(%arg0: i32) -> (i32, i32) {
    %c0_i32 = arith.constant 0 : i32
    %c0_i32_0 = arith.constant 0 : i32
    %c0_i32_1 = arith.constant 0 : i32
    return %c0_i32, %c0_i32_0 : i32, i32
  }
  func.func @transform_16(%arg0: i32) -> (i32, i32) {
    %c0_i32 = arith.constant 0 : i32
    %c0_i32_0 = arith.constant 0 : i32
    %c0_i32_1 = arith.constant 0 : i32
    return %c0_i32, %c0_i32_0 : i32, i32
  }
  func.func @transform_17(%arg0: i32) -> (i32, i32) {
    %c0_i32 = arith.constant 0 : i32
    %c0_i32_0 = arith.constant 0 : i32
    %c0_i32_1 = arith.constant 0 : i32
    return %c0_i32, %c0_i32_0 : i32, i32
  }
  func.func @transform_18(%arg0: i32) -> (i32, i32) {
    %c0_i32 = arith.constant 0 : i32
    %c0_i32_0 = arith.constant 0 : i32
    return %c0_i32, %arg0 : i32, i32
  }
}

</mosaic_0001>

<llo_original>
// kernel: csp_dark_block_forward.1
$region0: #{csp_dark_block_forward.1}
  #allocation0 [shape = 'u32[]', space=smem, size = 0x4, offset = 0x4, fixed_abs, tag = 'smem constant byte address 0x4 - core index']
  #allocation1 [shape = 'u32[144,128]{1,0:T(1,128)}', space=vmem, size = 0x12000, scoped, tag = 'internal scratch']
  %s0 = inlined_call_operand.vmem [shape: bf16[16,128], index: 0, kind: input, shape index: {}]
  %s1 = inlined_call_operand.vmem [shape: bf16[9,128], index: 1, kind: input, shape index: {}]
  %s2 = inlined_call_operand.vmem [shape: bf16[9,128], index: 2, kind: input, shape index: {}]
  %s3 = inlined_call_operand.vmem [shape: bf16[8,36], index: 3, kind: input, shape index: {}]
  %s4 = inlined_call_operand.vmem [shape: f32[8,1], index: 4, kind: input, shape index: {}]
  %s5 = inlined_call_operand.vmem [shape: bf16[4,8], index: 5, kind: input, shape index: {}]
  %s6 = inlined_call_operand.vmem [shape: f32[4,1], index: 6, kind: input, shape index: {}]
  %s7 = inlined_call_operand.vmem [shape: bf16[4,4], index: 7, kind: input, shape index: {}]
  %s8 = inlined_call_operand.vmem [shape: f32[4,1], index: 8, kind: input, shape index: {}]
  %s9 = inlined_call_operand.vmem [shape: bf16[4,36], index: 9, kind: input, shape index: {}]
  %s10 = inlined_call_operand.vmem [shape: f32[4,1], index: 10, kind: input, shape index: {}]
  %s11 = inlined_call_operand.vmem [shape: bf16[4,4], index: 11, kind: input, shape index: {}]
  %s12 = inlined_call_operand.vmem [shape: f32[4,1], index: 12, kind: input, shape index: {}]
  %s13 = inlined_call_operand.vmem [shape: bf16[4,8], index: 13, kind: input, shape index: {}]
  %s14 = inlined_call_operand.vmem [shape: f32[4,1], index: 14, kind: input, shape index: {}]
  %s15 = inlined_call_operand.vmem [shape: bf16[8,4], index: 15, kind: input, shape index: {}]
  %s16 = inlined_call_operand.vmem [shape: bf16[8,4], index: 16, kind: input, shape index: {}]
  %s17 = inlined_call_operand.vmem [shape: f32[8,1], index: 17, kind: input, shape index: {}]
  %s18 = inlined_call_operand.vmem [shape: bf16[8,128], index: 18, kind: output, shape index: {}]
  %s19 = sld [smem:[#allocation0]]
  $region82: #{csp_dark_block_forward.1} parent=0
    _
  %s21 = ssub.s32 1, %s19
  %s22 = scalar_select 0, %s21, %s19
  // Predicated region
  $region2: #{csp_dark_block_forward.1} parent=0 // pred_check
    _
  $region3: #{csp_dark_block_forward.1} parent=0 // pred_check_branch
    %24 = sbr.rel (0) target = $region5
  $region4: #{csp_dark_block_forward.1} parent=0 // pred_region
    _
  $region5: #{csp_dark_block_forward.1} parent=0 // pred_fallthru
    _
  // Predicated region
  $region6: #{csp_dark_block_forward.1} parent=0 // pred_check
    _
  $region7: #{csp_dark_block_forward.1} parent=0 // pred_check_branch
    %26 = sbr.rel (0) target = $region9
  $region8: #{csp_dark_block_forward.1} parent=0 // pred_region
    _
  $region9: #{csp_dark_block_forward.1} parent=0 // pred_fallthru
    _
  // Predicated region
  $region10: #{csp_dark_block_forward.1} parent=0 // pred_check
    _
  $region11: #{csp_dark_block_forward.1} parent=0 // pred_check_branch
    %28 = sbr.rel (0) target = $region13
  $region12: #{csp_dark_block_forward.1} parent=0 // pred_region
    _
  $region13: #{csp_dark_block_forward.1} parent=0 // pred_fallthru
    _
  // Predicated region
  $region14: #{csp_dark_block_forward.1} parent=0 // pred_check
    _
  $region15: #{csp_dark_block_forward.1} parent=0 // pred_check_branch
    %30 = sbr.rel (0) target = $region17
  $region16: #{csp_dark_block_forward.1} parent=0 // pred_region
    _
  $region17: #{csp_dark_block_forward.1} parent=0 // pred_fallthru
    _
  // Predicated region
  $region18: #{csp_dark_block_forward.1} parent=0 // pred_check
    _
  $region19: #{csp_dark_block_forward.1} parent=0 // pred_check_branch
    %32 = sbr.rel (0) target = $region21
  $region20: #{csp_dark_block_forward.1} parent=0 // pred_region
    _
  $region21: #{csp_dark_block_forward.1} parent=0 // pred_fallthru
    _
  // Predicated region
  $region22: #{csp_dark_block_forward.1} parent=0 // pred_check
    _
  $region23: #{csp_dark_block_forward.1} parent=0 // pred_check_branch
    %34 = sbr.rel (0) target = $region25
  $region24: #{csp_dark_block_forward.1} parent=0 // pred_region
    _
  $region25: #{csp_dark_block_forward.1} parent=0 // pred_fallthru
    _
  // Predicated region
  $region26: #{csp_dark_block_forward.1} parent=0 // pred_check
    _
  $region27: #{csp_dark_block_forward.1} parent=0 // pred_check_branch
    %36 = sbr.rel (0) target = $region29
  $region28: #{csp_dark_block_forward.1} parent=0 // pred_region
    _
  $region29: #{csp_dark_block_forward.1} parent=0 // pred_fallthru
    _
  // Predicated region
  $region30: #{csp_dark_block_forward.1} parent=0 // pred_check
    _
  $region31: #{csp_dark_block_forward.1} parent=0 // pred_check_branch
    %38 = sbr.rel (0) target = $region33
  $region32: #{csp_dark_block_forward.1} parent=0 // pred_region
    _
  $region33: #{csp_dark_block_forward.1} parent=0 // pred_fallthru
    _
  // Predicated region
  $region34: #{csp_dark_block_forward.1} parent=0 // pred_check
    _
  $region35: #{csp_dark_block_forward.1} parent=0 // pred_check_branch
    %40 = sbr.rel (0) target = $region37
  $region36: #{csp_dark_block_forward.1} parent=0 // pred_region
    _
  $region37: #{csp_dark_block_forward.1} parent=0 // pred_fallthru
    _
  // Predicated region
  $region38: #{csp_dark_block_forward.1} parent=0 // pred_check
    _
  $region39: #{csp_dark_block_forward.1} parent=0 // pred_check_branch
    %42 = sbr.rel (0) target = $region41
  $region40: #{csp_dark_block_forward.1} parent=0 // pred_region
    _
  $region41: #{csp_dark_block_forward.1} parent=0 // pred_fallthru
    _
  // Predicated region
  $region42: #{csp_dark_block_forward.1} parent=0 // pred_check
    _
  $region43: #{csp_dark_block_forward.1} parent=0 // pred_check_branch
    %44 = sbr.rel (0) target = $region45
  $region44: #{csp_dark_block_forward.1} parent=0 // pred_region
    _
  $region45: #{csp_dark_block_forward.1} parent=0 // pred_fallthru
    _
  // Predicated region
  $region46: #{csp_dark_block_forward.1} parent=0 // pred_check
    _
  $region47: #{csp_dark_block_forward.1} parent=0 // pred_check_branch
    %46 = sbr.rel (0) target = $region49
  $region48: #{csp_dark_block_forward.1} parent=0 // pred_region
    _
  $region49: #{csp_dark_block_forward.1} parent=0 // pred_fallthru
    _
  // Predicated region
  $region50: #{csp_dark_block_forward.1} parent=0 // pred_check
    _
  $region51: #{csp_dark_block_forward.1} parent=0 // pred_check_branch
    %48 = sbr.rel (0) target = $region53
  $region52: #{csp_dark_block_forward.1} parent=0 // pred_region
    _
  $region53: #{csp_dark_block_forward.1} parent=0 // pred_fallthru
    _
  // Predicated region
  $region54: #{csp_dark_block_forward.1} parent=0 // pred_check
    _
  $region55: #{csp_dark_block_forward.1} parent=0 // pred_check_branch
    %50 = sbr.rel (0) target = $region57
  $region56: #{csp_dark_block_forward.1} parent=0 // pred_region
    _
  $region57: #{csp_dark_block_forward.1} parent=0 // pred_fallthru
    _
  // Predicated region
  $region58: #{csp_dark_block_forward.1} parent=0 // pred_check
    _
  $region59: #{csp_dark_block_forward.1} parent=0 // pred_check_branch
    %52 = sbr.rel (0) target = $region61
  $region60: #{csp_dark_block_forward.1} parent=0 // pred_region
    _
  $region61: #{csp_dark_block_forward.1} parent=0 // pred_fallthru
    _
  // Predicated region
  $region62: #{csp_dark_block_forward.1} parent=0 // pred_check
    _
  $region63: #{csp_dark_block_forward.1} parent=0 // pred_check_branch
    %54 = sbr.rel (0) target = $region65
  $region64: #{csp_dark_block_forward.1} parent=0 // pred_region
    _
  $region65: #{csp_dark_block_forward.1} parent=0 // pred_fallthru
    _
  // Predicated region
  $region66: #{csp_dark_block_forward.1} parent=0 // pred_check
    _
  $region67: #{csp_dark_block_forward.1} parent=0 // pred_check_branch
    %56 = sbr.rel (0) target = $region69
  $region68: #{csp_dark_block_forward.1} parent=0 // pred_region
    _
  $region69: #{csp_dark_block_forward.1} parent=0 // pred_fallthru
    _
  // Predicated region
  $region70: #{csp_dark_block_forward.1} parent=0 // pred_check
    _
  $region71: #{csp_dark_block_forward.1} parent=0 // pred_check_branch
    %58 = sbr.rel (0) target = $region73
  $region72: #{csp_dark_block_forward.1} parent=0 // pred_region
    _
  $region73: #{csp_dark_block_forward.1} parent=0 // pred_fallthru
    _
  %v60 = vld [vmem:[%s1] sm:$0xf]
  %v61 = vld [vmem:[%s2] sm:$0xf]
  %v62 = vld [vmem:[%s2 + $0x4] sm:$0x1]
  %v63 = vld [vmem:[%s0] sm:$0xf]
  %v64 = vld [vmem:[%s0 + $0x4] sm:$0xf]
  %v66 = vunpack.c.l.b16 %v64
  %v67 = vpack.c.b16 %v66, %v66
  %68 = vrot.lane.b32.xlu0 %v67, 9
  %v69 = vpop.permute.xlu0 %68
  %v73 = vpack.i.b16 %v60, %v60
  %v75 = vlaneseq
  %v76 = vshrl.u32 %v75, 7
  %v77 = vsub.s32 0, %v76
  %v78 = vrot.slane %v73, %v77
  %v79 = vmul.bf16 %v69, %v78
  %80 = vrot.lane.b32.xlu0 %v67, 8
  %v81 = vpop.permute.xlu0 %80
  %vm82 = vcmask 64512
  %v85 = vshrl.u32 %v60, 16
  %v86 = vpack.i.b16 %v85, %v85
  %v88 = vlaneseq
  %v89 = vshrl.u32 %v88, 7
  %v90 = vsub.s32 0, %v89
  %v91 = vrot.slane %v86, %v90
  %v92 = vmul.bf16 %v81, %v91
  %v93 = vlaneseq
  %v94 = vshrl.u32 %v93, 7
  %v95 = vsub.s32 1, %v94
  %v96 = vrot.slane %v73, %v95
  %v97 = vmul.bf16 %v81, %v96
  %v99 = vunpack.c.l.b16 %v63
  %v100 = vpack.c.b16 %v99, %v99
  %101 = vrot.lane.b32.xlu0 %v100, 1
  %v102 = vpop.permute.xlu0 %101
  %v105 = vlaneseq
  %v106 = vshrl.u32 %v105, 7
  %v107 = vsub.s32 1, %v106
  %v108 = vrot.slane %v86, %v107
  %v109 = vmul.bf16 %v102, %v108
  %110 = vrot.lane.b32.xlu0 %v67, 1
  %v111 = vpop.permute.xlu0 %110
  %v114 = vlaneseq
  %v115 = vshrl.u32 %v114, 7
  %v116 = vsub.s32 3, %v115
  %v117 = vrot.slane %v73, %v116
  %v118 = vmul.bf16 %v111, %v117
  %v120 = vrot.slane %v79, 2
  %v122 = vrot.slane %v92, 6
  %v124 = vrot.slane %v97, 6
  %v126 = vrot.slane %v109, 4
  %v128 = vrot.slane %v118, 6
  %v129 = vrot.slane %v67, 2
  %vm130 = vcmask 1041408
  %v133 = vsel %vm130, %v120, %v122
  %vm134 = vcmask 1043456
  %v136 = vsel %vm134, %v133, %v124
  %vm137 = vcmask 1045504
  %v139 = vsel %vm137, %v136, %v126
  %v143 = vsel %vm134, %v63, %v128
  %v145 = vsel %vm137, %v143, %v129
  %v147 = vld [vmem:[%s3] sm:$0xf]
  %v148 = vld [vmem:[%s4] sm:$0xff]
  %150 = vset.pattern.permute.xlu0 0
  %151 = vperm.xlu0 %150, %v148
  %v152 = vpop.permute.xlu0 %151
  %vm154 = vcmask 293888
  %v156 = vsel %vm154, %v147, 0
  %v158 = vsel %vm130, %v129, 0
  %160 = vmatprep.subr.bf16.mxu0 0
  %161 = vmatpush1.bf16.msra.mxu0 0
  %162 = vmatprep.subr.bf16.mxu0 0
  %163 = vmatpush1.bf16.msra.mxu0 0
  %164 = vmatprep.subr.bf16.mxu0 0
  %165 = vmatpush1.bf16.msra.mxu0 0
  %166 = vmatprep.subr.bf16.mxu0 0
  %167 = vmatpush1.bf16.msra.mxu0 0
  %168 = vmatprep.subr.bf16.mxu0 0
  %169 = vmatpush1.bf16.msra.mxu0 0
  %170 = vmatprep.subr.bf16.mxu0 0
  %171 = vmatpush1.bf16.msra.mxu0 %v158
  %172 = vmatprep.subr.bf16.mxu0 0
  %173 = vmatpush1.bf16.msra.mxu0 %v145
  %174 = vmatprep.subr.bf16.mxu0 0
  %175 = vmatpush1.bf16.msra.mxu0 %v139
  %176 = vmatprep.subr.bf16.mxu0 0
  %177 = vmatpush2.bf16.msra.mxu0 0
  %178 = vmatprep.subr.bf16.mxu0 0
  %179 = vmatpush2.bf16.msra.mxu0 0
  %180 = vmatprep.subr.bf16.mxu0 0
  %181 = vmatpush2.bf16.msra.mxu0 0
  %182 = vmatprep.subr.bf16.mxu0 0
  %183 = vmatpush2.bf16.msra.mxu0 0
  %184 = vmatprep.subr.bf16.mxu0 0
  %185 = vmatpush2.bf16.msra.mxu0 0
  %186 = vmatprep.subr.bf16.mxu0 0
  %187 = vmatpush2.bf16.msra.mxu0 0
  %188 = vmatprep.subr.bf16.mxu0 0
  %189 = vmatpush2.bf16.msra.mxu0 0
  %190 = vmatprep.subr.bf16.mxu0 0
  %191 = vmatpush2.bf16.msra.mxu0 0
  %192 = vmatprep.mubr.bf16.mxu0 0
  %193 = vmatmul.mubr.bf16.gmra.mxu0 %v156
  %v194 = vpop.f32.mrf.mxu0
  %v195 = vadd.f32 %v152, %v194
  %v196 = vpop.f32.mrf.mxu0
  %v197 = vpop.f32.mrf.mxu0
  %v198 = vpop.f32.mrf.mxu0
  %199 = vdwg.mxu0
  %v200 = vmin.f32 %v195, 20.0
  %v201 = vmul.f32 %v200, 1.442695
  %v202 = vpow.pop %v201
  %v203 = vadd.f32 %v202, 1.0
  %v204 = vmul.f32 %v203, %v203
  %v205 = vsub.f32 %v204, 1.0
  %v206 = vadd.f32 %v204, 1.0
  %v207 = vrcp.pop %v206
  %v208 = vmul.f32 %v205, %v207
  %vm209 = vcmp.gt.f32.partialorder %v195, 20.0
  %v210 = vsel %vm209, 1.0, %v208
  %v211 = vmul.f32 %v195, %v210
  %v212 = vpack.c.bf16 %v211, %v211
  %v213 = vld [vmem:[%s5] sm:$0x3]
  %v214 = vld [vmem:[%s6] sm:$0xf]
  %216 = vset.pattern.permute.xlu0 0
  %217 = vperm.xlu0 %216, %v214
  %v218 = vpop.permute.xlu0 %217
  %v221 = vsel %vm82, %v213, 0
  %v224 = vsel %vm134, %v212, 0
  %226 = vmatprep.subr.bf16.mxu0 0
  %227 = vmatpush1.bf16.msra.mxu0 0
  %228 = vmatprep.subr.bf16.mxu0 0
  %229 = vmatpush1.bf16.msra.mxu0 0
  %230 = vmatprep.subr.bf16.mxu0 0
  %231 = vmatpush1.bf16.msra.mxu0 0
  %232 = vmatprep.subr.bf16.mxu0 0
  %233 = vmatpush1.bf16.msra.mxu0 0
  %234 = vmatprep.subr.bf16.mxu0 0
  %235 = vmatpush1.bf16.msra.mxu0 0
  %236 = vmatprep.subr.bf16.mxu0 0
  %237 = vmatpush1.bf16.msra.mxu0 0
  %238 = vmatprep.subr.bf16.mxu0 0
  %239 = vmatpush1.bf16.msra.mxu0 0
  %240 = vmatprep.subr.bf16.mxu0 0
  %241 = vmatpush1.bf16.msra.mxu0 %v224
  %242 = vmatprep.subr.bf16.mxu0 0
  %243 = vmatpush2.bf16.msra.mxu0 0
  %244 = vmatprep.subr.bf16.mxu0 0
  %245 = vmatpush2.bf16.msra.mxu0 0
  %246 = vmatprep.subr.bf16.mxu0 0
  %247 = vmatpush2.bf16.msra.mxu0 0
  %248 = vmatprep.subr.bf16.mxu0 0
  %249 = vmatpush2.bf16.msra.mxu0 0
  %250 = vmatprep.subr.bf16.mxu0 0
  %251 = vmatpush2.bf16.msra.mxu0 0
  %252 = vmatprep.subr.bf16.mxu0 0
  %253 = vmatpush2.bf16.msra.mxu0 0
  %254 = vmatprep.subr.bf16.mxu0 0
  %255 = vmatpush2.bf16.msra.mxu0 0
  %256 = vmatprep.subr.bf16.mxu0 0
  %257 = vmatpush2.bf16.msra.mxu0 0
  %258 = vmatprep.mubr.bf16.mxu0 0
  %259 = vmatmul.mubr.bf16.gmra.mxu0 %v221
  %v260 = vpop.f32.mrf.mxu0
  %v261 = vadd.f32 %v218, %v260
  %v262 = vpop.f32.mrf.mxu0
  %v263 = vpop.f32.mrf.mxu0
  %v264 = vpop.f32.mrf.mxu0
  %265 = vdwg.mxu0
  %v266 = vmin.f32 %v261, 20.0
  %v267 = vmul.f32 %v266, 1.442695
  %v268 = vpow.pop %v267
  %v269 = vadd.f32 %v268, 1.0
  %v270 = vmul.f32 %v269, %v269
  %v271 = vsub.f32 %v270, 1.0
  %v272 = vadd.f32 %v270, 1.0
  %v273 = vrcp.pop %v272
  %v274 = vmul.f32 %v271, %v273
  %vm275 = vcmp.gt.f32.partialorder %v261, 20.0
  %v276 = vsel %vm275, 1.0, %v274
  %v277 = vmul.f32 %v261, %v276
  %v278 = vld [vmem:[%s7] sm:$0x3]
  %v279 = vpack.c.bf16 %v277, %v277
  %v280 = vld [vmem:[%s8] sm:$0xf]
  %282 = vset.pattern.permute.xlu0 0
  %283 = vperm.xlu0 %282, %v280
  %v284 = vpop.permute.xlu0 %283
  %vm286 = vcmask 31744
  %v288 = vsel %vm286, %v278, 0
  %v291 = vsel %vm130, %v279, 0
  %293 = vmatprep.subr.bf16.mxu0 0
  %294 = vmatpush1.bf16.msra.mxu0 0
  %295 = vmatprep.subr.bf16.mxu0 0
  %296 = vmatpush1.bf16.msra.mxu0 0
  %297 = vmatprep.subr.bf16.mxu0 0
  %298 = vmatpush1.bf16.msra.mxu0 0
  %299 = vmatprep.subr.bf16.mxu0 0
  %300 = vmatpush1.bf16.msra.mxu0 0
  %301 = vmatprep.subr.bf16.mxu0 0
  %302 = vmatpush1.bf16.msra.mxu0 0
  %303 = vmatprep.subr.bf16.mxu0 0
  %304 = vmatpush1.bf16.msra.mxu0 0
  %305 = vmatprep.subr.bf16.mxu0 0
  %306 = vmatpush1.bf16.msra.mxu0 0
  %307 = vmatprep.subr.bf16.mxu0 0
  %308 = vmatpush1.bf16.msra.mxu0 %v291
  %309 = vmatprep.subr.bf16.mxu0 0
  %310 = vmatpush2.bf16.msra.mxu0 0
  %311 = vmatprep.subr.bf16.mxu0 0
  %312 = vmatpush2.bf16.msra.mxu0 0
  %313 = vmatprep.subr.bf16.mxu0 0
  %314 = vmatpush2.bf16.msra.mxu0 0
  %315 = vmatprep.subr.bf16.mxu0 0
  %316 = vmatpush2.bf16.msra.mxu0 0
  %317 = vmatprep.subr.bf16.mxu0 0
  %318 = vmatpush2.bf16.msra.mxu0 0
  %319 = vmatprep.subr.bf16.mxu0 0
  %320 = vmatpush2.bf16.msra.mxu0 0
  %321 = vmatprep.subr.bf16.mxu0 0
  %322 = vmatpush2.bf16.msra.mxu0 0
  %323 = vmatprep.subr.bf16.mxu0 0
  %324 = vmatpush2.bf16.msra.mxu0 0
  %325 = vmatprep.mubr.bf16.mxu0 0
  %326 = vmatmul.mubr.bf16.gmra.mxu0 %v288
  %v327 = vpop.f32.mrf.mxu0
  %v328 = vadd.f32 %v284, %v327
  %v329 = vpop.f32.mrf.mxu0
  %v330 = vpop.f32.mrf.mxu0
  %v331 = vpop.f32.mrf.mxu0
  %332 = vdwg.mxu0
  %v333 = vmin.f32 %v328, 20.0
  %v334 = vmul.f32 %v333, 1.442695
  %v335 = vpow.pop %v334
  %v336 = vadd.f32 %v335, 1.0
  %v337 = vmul.f32 %v336, %v336
  %v338 = vsub.f32 %v337, 1.0
  %v339 = vadd.f32 %v337, 1.0
  %v340 = vrcp.pop %v339
  %v341 = vmul.f32 %v338, %v340
  %vm342 = vcmp.gt.f32.partialorder %v328, 20.0
  %v343 = vsel %vm342, 1.0, %v341
  %v344 = vmul.f32 %v328, %v343
  %v345 = vpack.c.bf16 %v344, %v344
  %347 = vrot.lane.b32.xlu0 %v345, 9
  %v348 = vpop.permute.xlu0 %347
  %v352 = vpack.i.b16 %v61, %v61
  %v354 = vlaneseq
  %v355 = vshrl.u32 %v354, 7
  %v356 = vsub.s32 0, %v355
  %v357 = vrot.slane %v352, %v356
  %v358 = vmul.bf16 %v348, %v357
  %359 = vrot.lane.b32.xlu0 %v345, 8
  %v360 = vpop.permute.xlu0 %359
  %v363 = vshrl.u32 %v61, 16
  %v364 = vpack.i.b16 %v363, %v363
  %v366 = vlaneseq
  %v367 = vshrl.u32 %v366, 7
  %v368 = vsub.s32 0, %v367
  %v369 = vrot.slane %v364, %v368
  %v370 = vmul.bf16 %v360, %v369
  %371 = vrot.lane.b32.xlu0 %v345, 7
  %v372 = vpop.permute.xlu0 %371
  %v375 = vlaneseq
  %v376 = vshrl.u32 %v375, 7
  %v377 = vsub.s32 1, %v376
  %v378 = vrot.slane %v352, %v377
  %v379 = vmul.bf16 %v372, %v378
  %380 = vrot.lane.b32.xlu0 %v345, 1
  %v381 = vpop.permute.xlu0 %380
  %v384 = vlaneseq
  %v385 = vshrl.u32 %v384, 7
  %v386 = vsub.s32 1, %v385
  %v387 = vrot.slane %v364, %v386
  %v388 = vmul.bf16 %v381, %v387
  %389 = vrot.lane.b32.xlu0 %v345, 127
  %v390 = vpop.permute.xlu0 %389
  %v393 = vlaneseq
  %v394 = vshrl.u32 %v393, 7
  %v395 = vsub.s32 2, %v394
  %v396 = vrot.slane %v364, %v395
  %v397 = vmul.bf16 %v390, %v396
  %398 = vrot.lane.b32.xlu0 %v345, 121
  %v399 = vpop.permute.xlu0 %398
  %v402 = vlaneseq
  %v403 = vshrl.u32 %v402, 7
  %v404 = vsub.s32 3, %v403
  %v405 = vrot.slane %v352, %v404
  %v406 = vmul.bf16 %v399, %v405
  %407 = vrot.lane.b32.xlu0 %v345, 120
  %v408 = vpop.permute.xlu0 %407
  %v411 = vlaneseq
  %v412 = vshrl.u32 %v411, 7
  %v413 = vsub.s32 3, %v412
  %v414 = vrot.slane %v364, %v413
  %v415 = vmul.bf16 %v408, %v414
  %416 = vrot.lane.b32.xlu0 %v345, 119
  %v417 = vpop.permute.xlu0 %416
  %v421 = vpack.i.b16 %v62, %v62
  %v423 = vlaneseq
  %v424 = vshrl.u32 %v423, 7
  %v425 = vsub.s32 0, %v424
  %v426 = vrot.slane %v421, %v425
  %v427 = vmul.bf16 %v417, %v426
  %v429 = vrot.slane %v370, 6
  %v431 = vrot.slane %v379, 4
  %v433 = vrot.slane %v388, 2
  %v435 = vrot.slane %v397, 6
  %v437 = vrot.slane %v406, 4
  %v439 = vrot.slane %v415, 2
  %v442 = vsel %vm130, %v358, %v429
  %v444 = vsel %vm134, %v442, %v431
  %v446 = vsel %vm137, %v444, %v433
  %v450 = vsel %vm130, %v345, %v435
  %v452 = vsel %vm134, %v450, %v437
  %v454 = vsel %vm137, %v452, %v439
  %v456 = vld [vmem:[%s9] sm:$0x3]
  %v457 = vld [vmem:[%s10] sm:$0xf]
  %459 = vset.pattern.permute.xlu0 0
  %460 = vperm.xlu0 %459, %v457
  %v461 = vpop.permute.xlu0 %460
  %v464 = vsel %vm154, %v456, 0
  %v467 = vsel %vm130, %v427, 0
  %469 = vmatprep.subr.bf16.mxu0 0
  %470 = vmatpush1.bf16.msra.mxu0 0
  %471 = vmatprep.subr.bf16.mxu0 0
  %472 = vmatpush1.bf16.msra.mxu0 0
  %473 = vmatprep.subr.bf16.mxu0 0
  %474 = vmatpush1.bf16.msra.mxu0 0
  %475 = vmatprep.subr.bf16.mxu0 0
  %476 = vmatpush1.bf16.msra.mxu0 0
  %477 = vmatprep.subr.bf16.mxu0 0
  %478 = vmatpush1.bf16.msra.mxu0 0
  %479 = vmatprep.subr.bf16.mxu0 0
  %480 = vmatpush1.bf16.msra.mxu0 %v467
  %481 = vmatprep.subr.bf16.mxu0 0
  %482 = vmatpush1.bf16.msra.mxu0 %v454
  %483 = vmatprep.subr.bf16.mxu0 0
  %484 = vmatpush1.bf16.msra.mxu0 %v446
  %485 = vmatprep.subr.bf16.mxu0 0
  %486 = vmatpush2.bf16.msra.mxu0 0
  %487 = vmatprep.subr.bf16.mxu0 0
  %488 = vmatpush2.bf16.msra.mxu0 0
  %489 = vmatprep.subr.bf16.mxu0 0
  %490 = vmatpush2.bf16.msra.mxu0 0
  %491 = vmatprep.subr.bf16.mxu0 0
  %492 = vmatpush2.bf16.msra.mxu0 0
  %493 = vmatprep.subr.bf16.mxu0 0
  %494 = vmatpush2.bf16.msra.mxu0 0
  %495 = vmatprep.subr.bf16.mxu0 0
  %496 = vmatpush2.bf16.msra.mxu0 0
  %497 = vmatprep.subr.bf16.mxu0 0
  %498 = vmatpush2.bf16.msra.mxu0 0
  %499 = vmatprep.subr.bf16.mxu0 0
  %500 = vmatpush2.bf16.msra.mxu0 0
  %501 = vmatprep.mubr.bf16.mxu0 0
  %502 = vmatmul.mubr.bf16.gmra.mxu0 %v464
  %v503 = vpop.f32.mrf.mxu0
  %v504 = vadd.f32 %v461, %v503
  %v505 = vpop.f32.mrf.mxu0
  %v506 = vpop.f32.mrf.mxu0
  %v507 = vpop.f32.mrf.mxu0
  %508 = vdwg.mxu0
  %v509 = vmin.f32 %v504, 20.0
  %v510 = vmul.f32 %v509, 1.442695
  %v511 = vpow.pop %v510
  %v512 = vadd.f32 %v511, 1.0
  %v513 = vmul.f32 %v512, %v512
  %v514 = vsub.f32 %v513, 1.0
  %v515 = vadd.f32 %v513, 1.0
  %v516 = vrcp.pop %v515
  %v517 = vmul.f32 %v514, %v516
  %vm518 = vcmp.gt.f32.partialorder %v504, 20.0
  %v519 = vsel %vm518, 1.0, %v517
  %v520 = vmul.f32 %v504, %v519
  %v521 = vadd.f32 %v520, %v277
  %v522 = vld [vmem:[%s11] sm:$0x3]
  %v523 = vpack.c.bf16 %v521, %v521
  %v524 = vld [vmem:[%s12] sm:$0xf]
  %526 = vset.pattern.permute.xlu0 0
  %527 = vperm.xlu0 %526, %v524
  %v528 = vpop.permute.xlu0 %527
  %v531 = vsel %vm286, %v522, 0
  %v534 = vsel %vm130, %v523, 0
  %536 = vmatprep.subr.bf16.mxu0 0
  %537 = vmatpush1.bf16.msra.mxu0 0
  %538 = vmatprep.subr.bf16.mxu0 0
  %539 = vmatpush1.bf16.msra.mxu0 0
  %540 = vmatprep.subr.bf16.mxu0 0
  %541 = vmatpush1.bf16.msra.mxu0 0
  %542 = vmatprep.subr.bf16.mxu0 0
  %543 = vmatpush1.bf16.msra.mxu0 0
  %544 = vmatprep.subr.bf16.mxu0 0
  %545 = vmatpush1.bf16.msra.mxu0 0
  %546 = vmatprep.subr.bf16.mxu0 0
  %547 = vmatpush1.bf16.msra.mxu0 0
  %548 = vmatprep.subr.bf16.mxu0 0
  %549 = vmatpush1.bf16.msra.mxu0 0
  %550 = vmatprep.subr.bf16.mxu0 0
  %551 = vmatpush1.bf16.msra.mxu0 %v534
  %552 = vmatprep.subr.bf16.mxu0 0
  %553 = vmatpush2.bf16.msra.mxu0 0
  %554 = vmatprep.subr.bf16.mxu0 0
  %555 = vmatpush2.bf16.msra.mxu0 0
  %556 = vmatprep.subr.bf16.mxu0 0
  %557 = vmatpush2.bf16.msra.mxu0 0
  %558 = vmatprep.subr.bf16.mxu0 0
  %559 = vmatpush2.bf16.msra.mxu0 0
  %560 = vmatprep.subr.bf16.mxu0 0
  %561 = vmatpush2.bf16.msra.mxu0 0
  %562 = vmatprep.subr.bf16.mxu0 0
  %563 = vmatpush2.bf16.msra.mxu0 0
  %564 = vmatprep.subr.bf16.mxu0 0
  %565 = vmatpush2.bf16.msra.mxu0 0
  %566 = vmatprep.subr.bf16.mxu0 0
  %567 = vmatpush2.bf16.msra.mxu0 0
  %568 = vmatprep.mubr.bf16.mxu0 0
  %569 = vmatmul.mubr.bf16.gmra.mxu0 %v531
  %v570 = vpop.f32.mrf.mxu0
  %v571 = vadd.f32 %v528, %v570
  %v572 = vpop.f32.mrf.mxu0
  %v573 = vpop.f32.mrf.mxu0
  %v574 = vpop.f32.mrf.mxu0
  %575 = vdwg.mxu0
  %v576 = vmin.f32 %v571, 20.0
  %v577 = vmul.f32 %v576, 1.442695
  %v578 = vpow.pop %v577
  %v579 = vadd.f32 %v578, 1.0
  %v580 = vmul.f32 %v579, %v579
  %v581 = vsub.f32 %v580, 1.0
  %v582 = vadd.f32 %v580, 1.0
  %v583 = vrcp.pop %v582
  %v584 = vmul.f32 %v581, %v583
  %vm585 = vcmp.gt.f32.partialorder %v571, 20.0
  %v586 = vsel %vm585, 1.0, %v584
  %v587 = vmul.f32 %v571, %v586
  %v588 = vld [vmem:[%s13] sm:$0x3]
  %v589 = vld [vmem:[%s14] sm:$0xf]
  %591 = vset.pattern.permute.xlu0 0
  %592 = vperm.xlu0 %591, %v589
  %v593 = vpop.permute.xlu0 %592
  %v596 = vsel %vm82, %v588, 0
  %598 = vmatprep.subr.bf16.mxu0 0
  %599 = vmatpush1.bf16.msra.mxu0 0
  %600 = vmatprep.subr.bf16.mxu0 0
  %601 = vmatpush1.bf16.msra.mxu0 0
  %602 = vmatprep.subr.bf16.mxu0 0
  %603 = vmatpush1.bf16.msra.mxu0 0
  %604 = vmatprep.subr.bf16.mxu0 0
  %605 = vmatpush1.bf16.msra.mxu0 0
  %606 = vmatprep.subr.bf16.mxu0 0
  %607 = vmatpush1.bf16.msra.mxu0 0
  %608 = vmatprep.subr.bf16.mxu0 0
  %609 = vmatpush1.bf16.msra.mxu0 0
  %610 = vmatprep.subr.bf16.mxu0 0
  %611 = vmatpush1.bf16.msra.mxu0 0
  %612 = vmatprep.subr.bf16.mxu0 0
  %613 = vmatpush1.bf16.msra.mxu0 %v224
  %614 = vmatprep.subr.bf16.mxu0 0
  %615 = vmatpush2.bf16.msra.mxu0 0
  %616 = vmatprep.subr.bf16.mxu0 0
  %617 = vmatpush2.bf16.msra.mxu0 0
  %618 = vmatprep.subr.bf16.mxu0 0
  %619 = vmatpush2.bf16.msra.mxu0 0
  %620 = vmatprep.subr.bf16.mxu0 0
  %621 = vmatpush2.bf16.msra.mxu0 0
  %622 = vmatprep.subr.bf16.mxu0 0
  %623 = vmatpush2.bf16.msra.mxu0 0
  %624 = vmatprep.subr.bf16.mxu0 0
  %625 = vmatpush2.bf16.msra.mxu0 0
  %626 = vmatprep.subr.bf16.mxu0 0
  %627 = vmatpush2.bf16.msra.mxu0 0
  %628 = vmatprep.subr.bf16.mxu0 0
  %629 = vmatpush2.bf16.msra.mxu0 0
  %630 = vmatprep.mubr.bf16.mxu0 0
  %631 = vmatmul.mubr.bf16.gmra.mxu0 %v596
  %v632 = vpop.f32.mrf.mxu0
  %v633 = vadd.f32 %v593, %v632
  %v634 = vpop.f32.mrf.mxu0
  %v635 = vpop.f32.mrf.mxu0
  %v636 = vpop.f32.mrf.mxu0
  %637 = vdwg.mxu0
  %v638 = vmin.f32 %v633, 20.0
  %v639 = vmul.f32 %v638, 1.442695
  %v640 = vpow.pop %v639
  %v641 = vadd.f32 %v640, 1.0
  %v642 = vmul.f32 %v641, %v641
  %v643 = vsub.f32 %v642, 1.0
  %v644 = vadd.f32 %v642, 1.0
  %v645 = vrcp.pop %v644
  %v646 = vmul.f32 %v643, %v645
  %vm647 = vcmp.gt.f32.partialorder %v633, 20.0
  %v648 = vsel %vm647, 1.0, %v646
  %v649 = vmul.f32 %v633, %v648
  %v650 = vld [vmem:[%s15] sm:$0xf]
  %v651 = vpack.c.bf16 %v587, %v587
  %v652 = vld [vmem:[%s16] sm:$0xf]
  %v653 = vpack.c.bf16 %v649, %v649
  %v655 = vsel %vm286, %v652, 0
  %v658 = vsel %vm130, %v653, 0
  %660 = vmatprep.subr.bf16.mxu0 0
  %661 = vmatpush1.bf16.msra.mxu0 0
  %662 = vmatprep.subr.bf16.mxu0 0
  %663 = vmatpush1.bf16.msra.mxu0 0
  %664 = vmatprep.subr.bf16.mxu0 0
  %665 = vmatpush1.bf16.msra.mxu0 0
  %666 = vmatprep.subr.bf16.mxu0 0
  %667 = vmatpush1.bf16.msra.mxu0 0
  %668 = vmatprep.subr.bf16.mxu0 0
  %669 = vmatpush1.bf16.msra.mxu0 0
  %670 = vmatprep.subr.bf16.mxu0 0
  %671 = vmatpush1.bf16.msra.mxu0 0
  %672 = vmatprep.subr.bf16.mxu0 0
  %673 = vmatpush1.bf16.msra.mxu0 0
  %674 = vmatprep.subr.bf16.mxu0 0
  %675 = vmatpush1.bf16.msra.mxu0 %v658
  %676 = vmatprep.subr.bf16.mxu0 0
  %677 = vmatpush2.bf16.msra.mxu0 0
  %678 = vmatprep.subr.bf16.mxu0 0
  %679 = vmatpush2.bf16.msra.mxu0 0
  %680 = vmatprep.subr.bf16.mxu0 0
  %681 = vmatpush2.bf16.msra.mxu0 0
  %682 = vmatprep.subr.bf16.mxu0 0
  %683 = vmatpush2.bf16.msra.mxu0 0
  %684 = vmatprep.subr.bf16.mxu0 0
  %685 = vmatpush2.bf16.msra.mxu0 0
  %686 = vmatprep.subr.bf16.mxu0 0
  %687 = vmatpush2.bf16.msra.mxu0 0
  %688 = vmatprep.subr.bf16.mxu0 0
  %689 = vmatpush2.bf16.msra.mxu0 0
  %690 = vmatprep.subr.bf16.mxu0 0
  %691 = vmatpush2.bf16.msra.mxu0 0
  %692 = vmatprep.mubr.bf16.mxu0 0
  %693 = vmatmul.mubr.bf16.gmra.mxu0 %v655
  %v694 = vpop.f32.mrf.mxu0
  %v695 = vadd.f32 0.0, %v694
  %v696 = vpop.f32.mrf.mxu0
  %v697 = vpop.f32.mrf.mxu0
  %v698 = vpop.f32.mrf.mxu0
  %699 = vdwg.mxu0
  %v701 = vsel %vm286, %v650, 0
  %v704 = vsel %vm130, %v651, 0
  %706 = vmatprep.subr.bf16.mxu0 0
  %707 = vmatpush1.bf16.msra.mxu0 0
  %708 = vmatprep.subr.bf16.mxu0 0
  %709 = vmatpush1.bf16.msra.mxu0 0
  %710 = vmatprep.subr.bf16.mxu0 0
  %711 = vmatpush1.bf16.msra.mxu0 0
  %712 = vmatprep.subr.bf16.mxu0 0
  %713 = vmatpush1.bf16.msra.mxu0 0
  %714 = vmatprep.subr.bf16.mxu0 0
  %715 = vmatpush1.bf16.msra.mxu0 0
  %716 = vmatprep.subr.bf16.mxu0 0
  %717 = vmatpush1.bf16.msra.mxu0 0
  %718 = vmatprep.subr.bf16.mxu0 0
  %719 = vmatpush1.bf16.msra.mxu0 0
  %720 = vmatprep.subr.bf16.mxu0 0
  %721 = vmatpush1.bf16.msra.mxu0 %v704
  %722 = vmatprep.subr.bf16.mxu0 0
  %723 = vmatpush2.bf16.msra.mxu0 0
  %724 = vmatprep.subr.bf16.mxu0 0
  %725 = vmatpush2.bf16.msra.mxu0 0
  %726 = vmatprep.subr.bf16.mxu0 0
  %727 = vmatpush2.bf16.msra.mxu0 0
  %728 = vmatprep.subr.bf16.mxu0 0
  %729 = vmatpush2.bf16.msra.mxu0 0
  %730 = vmatprep.subr.bf16.mxu0 0
  %731 = vmatpush2.bf16.msra.mxu0 0
  %732 = vmatprep.subr.bf16.mxu0 0
  %733 = vmatpush2.bf16.msra.mxu0 0
  %734 = vmatprep.subr.bf16.mxu0 0
  %735 = vmatpush2.bf16.msra.mxu0 0
  %736 = vmatprep.subr.bf16.mxu0 0
  %737 = vmatpush2.bf16.msra.mxu0 0
  %738 = vmatprep.mubr.bf16.mxu0 0
  %739 = vmatmul.mubr.bf16.gmra.mxu0 %v701
  %v740 = vpop.f32.mrf.mxu0
  %v741 = vadd.f32 %v695, %v740
  %v742 = vpop.f32.mrf.mxu0
  %v743 = vpop.f32.mrf.mxu0
  %v744 = vpop.f32.mrf.mxu0
  %745 = vdwg.mxu0
  %v746 = vld [vmem:[%s17] sm:$0xff]
  %748 = vset.pattern.permute.xlu0 0
  %749 = vperm.xlu0 %748, %v746
  %v750 = vpop.permute.xlu0 %749
  %v752 = vadd.f32 %v741, %v750
  %v753 = vmin.f32 %v752, 20.0
  %v754 = vmul.f32 %v753, 1.442695
  %v755 = vpow.pop %v754
  %v756 = vadd.f32 %v755, 1.0
  %v757 = vmul.f32 %v756, %v756
  %v758 = vsub.f32 %v757, 1.0
  %v759 = vadd.f32 %v757, 1.0
  %v760 = vrcp.pop %v759
  %v761 = vmul.f32 %v758, %v760
  %vm762 = vcmp.gt.f32.partialorder %v752, 20.0
  %v763 = vsel %vm762, 1.0, %v761
  %v764 = vmul.f32 %v752, %v763
  %v765 = vpack.c.bf16 %v764, %v764
  %766 = vst [vmem:[%s18] sm:$0xf] %v765
  // Predicated region
  $region74: #{csp_dark_block_forward.1} parent=0 // pred_check
    _
  $region75: #{csp_dark_block_forward.1} parent=0 // pred_check_branch
    %768 = sbr.rel (0) target = $region77
  $region76: #{csp_dark_block_forward.1} parent=0 // pred_region
    _
  $region77: #{csp_dark_block_forward.1} parent=0 // pred_fallthru
    _
  // Predicated region
  $region78: #{csp_dark_block_forward.1} parent=0 // pred_check
    _
  $region79: #{csp_dark_block_forward.1} parent=0 // pred_check_branch
    %770 = sbr.rel (0) target = $region81
  $region80: #{csp_dark_block_forward.1} parent=0 // pred_region
    _
  $region81: #{csp_dark_block_forward.1} parent=0 // pred_fallthru
    _

</llo_original>
